<compile_context>
chip_gen: v6e
topology: v6e:2x2x1
jax: 0.10.0
libtpu: 0.0.40
codegen_flags: <defaults>
</compile_context>

<pallas_src>
import jax
import jax.numpy as jnp
from jax.experimental import pallas as pl
from jax.experimental.pallas import tpu as pltpu

DIMS = [768, 1024, 128, 64, 16, 1]   # feature sizes of the 5 Linear layers
TB_CAP = 1024                        # v7x-safe tile cap (64 MiB VMEM / TC)


def _round_up(x, m):
    return (x + m - 1) // m * m


def mlp_kernel(x_ref, w1_ref, b1_ref, w2_ref, b2_ref, wt_ref, bt_ref, o_ref):
    """Fused MLP tile: 768 -> 1024 -> 128 -> 1 (folded tail on the VPU)."""
    # In-kernel bf16 cast (VPU work hidden under the MXU-bound first layer).
    x = x_ref[...].astype(jnp.bfloat16)
    h = jnp.dot(x, w1_ref[...], preferred_element_type=jnp.float32)
    h = h + b1_ref[...]
    h = jnp.dot(h.astype(jnp.bfloat16), w2_ref[...],
                preferred_element_type=jnp.float32)
    h = h + b2_ref[...]
    # Folded tail 128->64->16->1 as elementwise mul + lane reduction:
    # VPU/XLU slots are idle under the MXU-bound layers, and the (TB,1)
    # output writes 4 B/row instead of 512 B/row.
    o_ref[...] = jnp.sum(h * wt_ref[...], axis=-1, keepdims=True) + bt_ref[...]


def init_params(key, dtype=jnp.float32):
    """Deterministic synthetic parameters with nn.Linear-style shapes.

    Weights are created as (in, out); biases as (1, out) so they live as 2-D
    tiles in VMEM and broadcast over the batch row axis.
    """
    params = []
    for i in range(5):
        d_in, d_out = DIMS[i], DIMS[i + 1]
        key, kw, kb = jax.random.split(key, 3)
        bound = 1.0 / (d_in ** 0.5)  # matches torch.nn.Linear default init range
        w = jax.random.uniform(kw, (d_in, d_out), dtype, -bound, bound)
        b = jax.random.uniform(kb, (1, d_out), dtype, -bound, bound)
        params.append((w, b))
    return params


def prepare_params(params):
    """Fold layers 3-5 into one affine map (exact at eval time).

    Returns MXU weights in bf16, biases and the folded tail (applied on the
    VPU) in f32.  Folded tail is a (1, 128) row + (1, 1) bias.
    """
    (w1, b1), (w2, b2), (w3, b3), (w4, b4), (w5, b5) = params
    f32 = jnp.float32
    # y = ((h@W3+b3)@W4+b4)@W5+b5  ==  h @ wt + bt   (all in f32, exact)
    wt = w3.astype(f32) @ w4.astype(f32) @ w5.astype(f32)                  # (128, 1)
    bt = (b3.astype(f32) @ w4.astype(f32) + b4.astype(f32)) @ w5.astype(f32) \
        + b5.astype(f32)                                                   # (1, 1)
    return (w1.astype(jnp.bfloat16), b1.astype(f32),
            w2.astype(jnp.bfloat16), b2.astype(f32),
            wt.T.astype(f32),        # (1, 128) row, stays f32 (VPU tail)
            bt.astype(f32))          # (1, 1)


@jax.jit
def mlp_forward(x, prepped):
    """x: (B, 768) -> (B, 1)."""
    w1, b1, w2, b2, wt, bt = prepped
    B = x.shape[0]
    # Adaptive tile: no 248 garbage rows for tiny B, capped for VMEM on v7x.
    tb = min(_round_up(max(B, 8), 8), TB_CAP)
    n_tiles = pl.cdiv(B, tb)

    def resident(arr):
        # constant block index across the grid -> DMA'd once, VMEM-resident
        return pl.BlockSpec(arr.shape, lambda i: (0,) * arr.ndim)

    flops = 2 * B * (DIMS[0] * DIMS[1] + DIMS[1] * DIMS[2] + DIMS[2])
    bytes_accessed = (x.size * x.dtype.itemsize
                      + sum(a.size * a.dtype.itemsize for a in prepped)
                      + B * 4)

    out = pl.pallas_call(
        mlp_kernel,
        out_shape=jax.ShapeDtypeStruct((B, 1), jnp.float32),
        grid=(n_tiles,),
        in_specs=[
            pl.BlockSpec((tb, DIMS[0]), lambda i: (i, 0)),   # x: batch-tiled
            resident(w1), resident(b1),
            resident(w2), resident(b2),
            resident(wt), resident(bt),
        ],
        out_specs=pl.BlockSpec((tb, 1), lambda i: (i, 0)),   # (B,1): no slice pass
        compiler_params=pltpu.CompilerParams(
            dimension_semantics=("parallel",),   # shard batch tiles on v7x megacore
            vmem_limit_bytes=32 << 20,           # ~16 MiB working set at tb=1024
        ),
        cost_estimate=pl.CostEstimate(flops=flops, transcendentals=0,
                                      bytes_accessed=bytes_accessed),
    )(x, w1, b1, w2, b2, wt, bt)
    return out.astype(x.dtype)


def mlp_reference(x, params):
    """Pure-JAX f32 sequential reference (eval-mode dropout == identity)."""
    h = x.astype(jnp.float32)
    for w, b in params:
        h = h @ w.astype(jnp.float32) + b.astype(jnp.float32)
    return h.astype(x.dtype)


if __name__ == "__main__":
    key = jax.random.PRNGKey(0)
    kx, kp = jax.random.split(key)

    B = 8  # small batch
    x = jax.random.normal(kx, (B, DIMS[0]), jnp.float32)
    params = init_params(kp)
    prepped = prepare_params(params)

    out = mlp_forward(x, prepped)
    out = jax.block_until_ready(out)

    ref = mlp_reference(x, params)
    assert out.shape == (B, 1), out.shape
    # bf16 MXU operands (f32 accumulation) vs all-f32 reference -> loosened tolerance
    max_err = float(jnp.max(jnp.abs(out.astype(jnp.float32) - ref.astype(jnp.float32))))
    assert jnp.allclose(out, ref, atol=5e-2, rtol=5e-2), max_err

    print("KERNEL_OK")
</pallas_src>

<mosaic_0001>
module attributes {stable_mosaic.version = 11 : i64} {
  func.func @mlp_kernel(%arg0: i32, %arg1: memref<8x768xf32, #tpu.memory_space<vmem>>, %arg2: memref<768x1024xbf16, #tpu.memory_space<vmem>>, %arg3: memref<1x1024xf32, #tpu.memory_space<vmem>>, %arg4: memref<1024x128xbf16, #tpu.memory_space<vmem>>, %arg5: memref<1x128xf32, #tpu.memory_space<vmem>>, %arg6: memref<1x128xf32, #tpu.memory_space<vmem>>, %arg7: memref<1x1xf32, #tpu.memory_space<vmem>>, %arg8: memref<8x1xf32, #tpu.memory_space<vmem>>) attributes {dimension_semantics = [#tpu.dimension_semantics<parallel>], iteration_bounds = array<i64: 1>, scalar_prefetch = 0 : i64, scratch_operands = 0 : i64, tpu.core_type = #tpu.core_type<tc>, window_params = [{transform_indices = @transform_0, window_bounds = array<i64: 8, 768>}, {pipeline_mode = #tpu.pipeline_mode<synchronous>, transform_indices = @transform_1, window_bounds = array<i64: 768, 1024>}, {pipeline_mode = #tpu.pipeline_mode<synchronous>, transform_indices = @transform_2, window_bounds = array<i64: 1, 1024>}, {pipeline_mode = #tpu.pipeline_mode<synchronous>, transform_indices = @transform_3, window_bounds = array<i64: 1024, 128>}, {pipeline_mode = #tpu.pipeline_mode<synchronous>, transform_indices = @transform_4, window_bounds = array<i64: 1, 128>}, {pipeline_mode = #tpu.pipeline_mode<synchronous>, transform_indices = @transform_5, window_bounds = array<i64: 1, 128>}, {pipeline_mode = #tpu.pipeline_mode<synchronous>, transform_indices = @transform_6, window_bounds = array<i64: 1, 1>}, {transform_indices = @transform_7, window_bounds = array<i64: 8, 1>}]} {
    %c0 = arith.constant 0 : index
    %c0_0 = arith.constant 0 : index
    %0 = vector.load %arg1[%c0, %c0_0] : memref<8x768xf32, #tpu.memory_space<vmem>>, vector<8x768xf32>
    %1 = arith.truncf %0 : vector<8x768xf32> to vector<8x768xbf16>
    %c0_1 = arith.constant 0 : index
    %c0_2 = arith.constant 0 : index
    %2 = vector.load %arg2[%c0_1, %c0_2] : memref<768x1024xbf16, #tpu.memory_space<vmem>>, vector<768x1024xbf16>
    %cst = arith.constant dense<0.000000e+00> : vector<8x1024xf32>
    %3 = tpu.matmul %1, %2, %cst {dimension_numbers = #tpu.dot_dimension_numbers<[1], [0], [0], [1], [0, 0, 1, 1], [], []>} : vector<8x768xbf16>, vector<768x1024xbf16>, vector<8x1024xf32> -> vector<8x1024xf32>
    %c0_3 = arith.constant 0 : index
    %c0_4 = arith.constant 0 : index
    %4 = vector.load %arg3[%c0_3, %c0_4] : memref<1x1024xf32, #tpu.memory_space<vmem>>, vector<1x1024xf32>
    %5 = vector.broadcast %4 : vector<1x1024xf32> to vector<8x1024xf32>
    %6 = arith.addf %3, %5 : vector<8x1024xf32>
    %7 = arith.truncf %6 : vector<8x1024xf32> to vector<8x1024xbf16>
    %c0_5 = arith.constant 0 : index
    %c0_6 = arith.constant 0 : index
    %8 = vector.load %arg4[%c0_5, %c0_6] : memref<1024x128xbf16, #tpu.memory_space<vmem>>, vector<1024x128xbf16>
    %cst_7 = arith.constant dense<0.000000e+00> : vector<8x128xf32>
    %9 = tpu.matmul %7, %8, %cst_7 {dimension_numbers = #tpu.dot_dimension_numbers<[1], [0], [0], [1], [0, 0, 1, 1], [], []>} : vector<8x1024xbf16>, vector<1024x128xbf16>, vector<8x128xf32> -> vector<8x128xf32>
    %c0_8 = arith.constant 0 : index
    %c0_9 = arith.constant 0 : index
    %10 = vector.load %arg5[%c0_8, %c0_9] : memref<1x128xf32, #tpu.memory_space<vmem>>, vector<1x128xf32>
    %11 = vector.broadcast %10 : vector<1x128xf32> to vector<8x128xf32>
    %12 = arith.addf %9, %11 : vector<8x128xf32>
    %c0_10 = arith.constant 0 : index
    %c0_11 = arith.constant 0 : index
    %13 = vector.load %arg6[%c0_10, %c0_11] : memref<1x128xf32, #tpu.memory_space<vmem>>, vector<1x128xf32>
    %14 = vector.broadcast %13 : vector<1x128xf32> to vector<8x128xf32>
    %15 = arith.mulf %12, %14 : vector<8x128xf32>
    %cst_12 = arith.constant dense<0.000000e+00> : vector<8xf32>
    %16 = vector.multi_reduction <add>, %15, %cst_12 [1] : vector<8x128xf32> to vector<8xf32>
    %17 = vector.shape_cast %16 : vector<8xf32> to vector<8x1xf32>
    %c0_13 = arith.constant 0 : index
    %c0_14 = arith.constant 0 : index
    %18 = vector.load %arg7[%c0_13, %c0_14] : memref<1x1xf32, #tpu.memory_space<vmem>>, vector<1x1xf32>
    %19 = vector.broadcast %18 : vector<1x1xf32> to vector<8x1xf32>
    %20 = arith.addf %17, %19 : vector<8x1xf32>
    %c0_15 = arith.constant 0 : index
    %c0_16 = arith.constant 0 : index
    %21 = vector.load %arg8[%c0_15, %c0_16] : memref<8x1xf32, #tpu.memory_space<vmem>>, vector<8x1xf32>
    tpu.vector_store %arg8[%c0_15, %c0_16], %20 {strides = array<i32>} : memref<8x1xf32, #tpu.memory_space<vmem>>, vector<8x1xf32>,
    return
  }
  func.func @transform_0(%arg0: i32) -> (i32, i32) {
    %c0_i32 = arith.constant 0 : i32
    %c0_i32_0 = arith.constant 0 : i32
    return %arg0, %c0_i32 : i32, i32
  }
  func.func @transform_1(%arg0: i32) -> (i32, i32) {
    %c0_i32 = arith.constant 0 : i32
    %c0_i32_0 = arith.constant 0 : i32
    %c0_i32_1 = arith.constant 0 : i32
    return %c0_i32, %c0_i32_0 : i32, i32
  }
  func.func @transform_2(%arg0: i32) -> (i32, i32) {
    %c0_i32 = arith.constant 0 : i32
    %c0_i32_0 = arith.constant 0 : i32
    %c0_i32_1 = arith.constant 0 : i32
    return %c0_i32, %c0_i32_0 : i32, i32
  }
  func.func @transform_3(%arg0: i32) -> (i32, i32) {
    %c0_i32 = arith.constant 0 : i32
    %c0_i32_0 = arith.constant 0 : i32
    %c0_i32_1 = arith.constant 0 : i32
    return %c0_i32, %c0_i32_0 : i32, i32
  }
  func.func @transform_4(%arg0: i32) -> (i32, i32) {
    %c0_i32 = arith.constant 0 : i32
    %c0_i32_0 = arith.constant 0 : i32
    %c0_i32_1 = arith.constant 0 : i32
    return %c0_i32, %c0_i32_0 : i32, i32
  }
  func.func @transform_5(%arg0: i32) -> (i32, i32) {
    %c0_i32 = arith.constant 0 : i32
    %c0_i32_0 = arith.constant 0 : i32
    %c0_i32_1 = arith.constant 0 : i32
    return %c0_i32, %c0_i32_0 : i32, i32
  }
  func.func @transform_6(%arg0: i32) -> (i32, i32) {
    %c0_i32 = arith.constant 0 : i32
    %c0_i32_0 = arith.constant 0 : i32
    %c0_i32_1 = arith.constant 0 : i32
    return %c0_i32, %c0_i32_0 : i32, i32
  }
  func.func @transform_7(%arg0: i32) -> (i32, i32) {
    %c0_i32 = arith.constant 0 : i32
    %c0_i32_0 = arith.constant 0 : i32
    return %arg0, %c0_i32 : i32, i32
  }
}

</mosaic_0001>

<llo_original>
// kernel: mlp_forward.1
$region0: #{mlp_forward.1}
  #allocation0 [shape = 'u32[]', space=smem, size = 0x4, offset = 0x4, fixed_abs, tag = 'smem constant byte address 0x4 - core index']
  #allocation1 [shape = 'u32[144,128]{1,0:T(1,128)}', space=vmem, size = 0x12000, scoped, tag = 'internal scratch']
  #allocation2 [shape = 'f32[1,1]{1,0:T(1,128)S(1)}', space=vmem, size = 0x200, scoped, tag = 'scoped memory for mlp_forward.1']
  %s0 = inlined_call_operand.hbm [shape: f32[8,768], index: 0, kind: input, shape index: {}]
  %s1 = inlined_call_operand.hbm [shape: bf16[768,1024], index: 1, kind: input, shape index: {}]
  %s2 = inlined_call_operand.hbm [shape: f32[1,1024], index: 2, kind: input, shape index: {}]
  %s3 = inlined_call_operand.hbm [shape: bf16[1024,128], index: 3, kind: input, shape index: {}]
  %s4 = inlined_call_operand.hbm [shape: f32[1,128], index: 4, kind: input, shape index: {}]
  %s5 = inlined_call_operand.hbm [shape: f32[1,128], index: 5, kind: input, shape index: {}]
  %s6 = inlined_call_operand.<no memory space> [shape: f32[1,1], index: 6, kind: input, shape index: {}]
  %s7 = inlined_call_operand.vmem [shape: f32[8,1], index: 7, kind: output, shape index: {}]
  %s8 = sld [smem:[#allocation0]]
  $region62: #{mlp_forward.1} parent=0
    _
  %s10 = ssub.s32 1, %s8
  %s11 = scalar_select 0, %s10, %s8
  %v12 = vstv %s6
  %13 = vst [vmem:[#allocation2] sm:$0x1] %v12
  $region1: #{mlp_forward.1} parent=0
    #allocation3 [shape = 'u8[24576]{0}', space=vmem, size = 0x6000, scoped, tag = 'input window, operand 0, single buffered']
    #allocation4 [shape = 's32[1]{0}', space=sflag, size = 0x4, scoped, tag = 'scoped memory for mlp_forward.1']
    #allocation5 [shape = 'u8[1572864]{0}', space=vmem, size = 0x180000, scoped, tag = 'input window, operand 1, single buffered']
    #allocation6 [shape = 's32[1]{0}', space=sflag, size = 0x4, scoped, tag = 'scoped memory for mlp_forward.1']
    #allocation7 [shape = 'u8[4096]{0}', space=vmem, size = 0x1000, scoped, tag = 'input window, operand 2, single buffered']
    #allocation8 [shape = 'u8[262144]{0}', space=vmem, size = 0x40000, scoped, tag = 'input window, operand 3, single buffered']
    #allocation9 [shape = 's32[1]{0}', space=sflag, size = 0x4, scoped, tag = 'scoped memory for mlp_forward.1']
    #allocation10 [shape = 'u8[512]{0}', space=vmem, size = 0x400, scoped, tag = 'input window, operand 4, single buffered']
    #allocation11 [shape = 'u8[512]{0}', space=vmem, size = 0x400, scoped, tag = 'input window, operand 5, single buffered']
    #allocation12 [shape = 's32[1]{0}', space=sflag, size = 0x4, scoped, tag = 'scoped memory for mlp_forward.1']
    %14 = vsyncpa [#allocation4], 0
    %15 = vsyncpa [#allocation6], 0
    %16 = vsyncpa [#allocation9], 0
    %17 = vsyncpa [#allocation12], 0
    // Predicated region
    $region2: #{mlp_forward.1} parent=1 // pred_check
      _
    $region3: #{mlp_forward.1} parent=1 // pred_check_branch
      %19 = sbr.rel (0) target = $region5
    $region4: #{mlp_forward.1} parent=1 // pred_region
      %s21 = ssub.s32 768, 768
      %22 = vsyncadd [#allocation4], %s21
      %s24 = sshll.u32 [#allocation3], 4
      %s25 = int_to_ptr.vmem [resolvable:$true] %s24
      %27 = dma.hbm_to_vmem [thread:$0]  %s0, 768, %s25, [#allocation4]
    $region5: #{mlp_forward.1} parent=1 // pred_fallthru
      _
    // Predicated region
    $region6: #{mlp_forward.1} parent=1 // pred_check
      _
    $region7: #{mlp_forward.1} parent=1 // pred_check_branch
      %29 = sbr.rel (0) target = $region9
    $region8: #{mlp_forward.1} parent=1 // pred_region
      %s31 = ssub.s32 49152, 49152
      %32 = vsyncadd [#allocation6], %s31
      %s33 = sshll.u32 [#allocation5], 4
      %s34 = int_to_ptr.vmem [resolvable:$true] %s33
      %39 = dma.hbm_to_vmem [thread:$0]  %s1, 49152, %s34, [#allocation6], 512, 512, 32
    $region9: #{mlp_forward.1} parent=1 // pred_fallthru
      _
    // Predicated region
    $region10: #{mlp_forward.1} parent=1 // pred_check
      _
    $region11: #{mlp_forward.1} parent=1 // pred_check_branch
      %41 = sbr.rel (0) target = $region13
    $region12: #{mlp_forward.1} parent=1 // pred_region
      %s43 = ssub.s32 128, 128
      %44 = vsyncadd [#allocation6], %s43
      %s46 = sshll.u32 [#allocation7], 4
      %s47 = int_to_ptr.vmem [resolvable:$true] %s46
      %49 = dma.hbm_to_vmem [thread:$0]  %s2, 128, %s47, [#allocation6]
    $region13: #{mlp_forward.1} parent=1 // pred_fallthru
      _
    // Predicated region
    $region14: #{mlp_forward.1} parent=1 // pred_check
      _
    $region15: #{mlp_forward.1} parent=1 // pred_check_branch
      %51 = sbr.rel (0) target = $region17
    $region16: #{mlp_forward.1} parent=1 // pred_region
      %s53 = ssub.s32 8192, 8192
      %54 = vsyncadd [#allocation9], %s53
      %s55 = sshll.u32 [#allocation8], 4
      %s56 = int_to_ptr.vmem [resolvable:$true] %s55
      %61 = dma.hbm_to_vmem [thread:$0]  %s3, 8192, %s56, [#allocation9], 64, 64, 4
    $region17: #{mlp_forward.1} parent=1 // pred_fallthru
      _
    // Predicated region
    $region18: #{mlp_forward.1} parent=1 // pred_check
      _
    $region19: #{mlp_forward.1} parent=1 // pred_check_branch
      %63 = sbr.rel (0) target = $region21
    $region20: #{mlp_forward.1} parent=1 // pred_region
      %s65 = ssub.s32 16, 16
      %66 = vsyncadd [#allocation9], %s65
      %s68 = sshll.u32 [#allocation10], 4
      %s69 = int_to_ptr.vmem [resolvable:$true] %s68
      %71 = dma.hbm_to_vmem [thread:$0]  %s4, 16, %s69, [#allocation9]
    $region21: #{mlp_forward.1} parent=1 // pred_fallthru
      _
    // Predicated region
    $region22: #{mlp_forward.1} parent=1 // pred_check
      _
    $region23: #{mlp_forward.1} parent=1 // pred_check_branch
      %73 = sbr.rel (0) target = $region25
    $region24: #{mlp_forward.1} parent=1 // pred_region
      %s75 = ssub.s32 16, 16
      %76 = vsyncadd [#allocation12], %s75
      %s78 = sshll.u32 [#allocation11], 4
      %s79 = int_to_ptr.vmem [resolvable:$true] %s78
      %81 = dma.hbm_to_vmem [thread:$0]  %s5, 16, %s79, [#allocation12]
    $region25: #{mlp_forward.1} parent=1 // pred_fallthru
      _
    // Predicated region
    $region26: #{mlp_forward.1} parent=1 // pred_check
      _
    $region27: #{mlp_forward.1} parent=1 // pred_check_branch
      %83 = sbr.rel (0) target = $region29
    $region28: #{mlp_forward.1} parent=1 // pred_region
      _
    $region29: #{mlp_forward.1} parent=1 // pred_fallthru
      _
    // Predicated region
    $region30: #{mlp_forward.1} parent=1 // pred_check
      _
    $region31: #{mlp_forward.1} parent=1 // pred_check_branch
      %85 = sbr.rel (0) target = $region33
    $region32: #{mlp_forward.1} parent=1 // pred_region
      %86 = dma.done [#allocation4], 768
    $region33: #{mlp_forward.1} parent=1 // pred_fallthru
      _
    // Predicated region
    $region34: #{mlp_forward.1} parent=1 // pred_check
      _
    $region35: #{mlp_forward.1} parent=1 // pred_check_branch
      %88 = sbr.rel (0) target = $region37
    $region36: #{mlp_forward.1} parent=1 // pred_region
      %89 = dma.done [#allocation6], 49152
    $region37: #{mlp_forward.1} parent=1 // pred_fallthru
      _
    // Predicated region
    $region38: #{mlp_forward.1} parent=1 // pred_check
      _
    $region39: #{mlp_forward.1} parent=1 // pred_check_branch
      %91 = sbr.rel (0) target = $region41
    $region40: #{mlp_forward.1} parent=1 // pred_region
      %92 = dma.done [#allocation6], 128
    $region41: #{mlp_forward.1} parent=1 // pred_fallthru
      _
    // Predicated region
    $region42: #{mlp_forward.1} parent=1 // pred_check
      _
    $region43: #{mlp_forward.1} parent=1 // pred_check_branch
      %94 = sbr.rel (0) target = $region45
    $region44: #{mlp_forward.1} parent=1 // pred_region
      %95 = dma.done [#allocation9], 8192
    $region45: #{mlp_forward.1} parent=1 // pred_fallthru
      _
    // Predicated region
    $region46: #{mlp_forward.1} parent=1 // pred_check
      _
    $region47: #{mlp_forward.1} parent=1 // pred_check_branch
      %97 = sbr.rel (0) target = $region49
    $region48: #{mlp_forward.1} parent=1 // pred_region
      %98 = dma.done [#allocation9], 16
    $region49: #{mlp_forward.1} parent=1 // pred_fallthru
      _
    // Predicated region
    $region50: #{mlp_forward.1} parent=1 // pred_check
      _
    $region51: #{mlp_forward.1} parent=1 // pred_check_branch
      %100 = sbr.rel (0) target = $region53
    $region52: #{mlp_forward.1} parent=1 // pred_region
      %101 = dma.done [#allocation12], 16
    $region53: #{mlp_forward.1} parent=1 // pred_fallthru
      _
    %v103 = vld [vmem:[#allocation3] sm:$0xff]
    %v104 = vld [vmem:[#allocation3 + $0x8] sm:$0xff]
    %v105 = vld [vmem:[#allocation3 + $0x10] sm:$0xff]
    %v106 = vld [vmem:[#allocation3 + $0x18] sm:$0xff]
    %v107 = vld [vmem:[#allocation3 + $0x20] sm:$0xff]
    %v108 = vld [vmem:[#allocation3 + $0x28] sm:$0xff]
    %v109 = vpack.c.bf16 %v103, %v103
    %v110 = vpack.c.bf16 %v104, %v104
    %v111 = vpack.c.bf16 %v105, %v105
    %v112 = vpack.c.bf16 %v106, %v106
    %v113 = vpack.c.bf16 %v107, %v107
    %v114 = vpack.c.bf16 %v108, %v108
    %v115 = vld [vmem:[#allocation5] sm:$0xff]
    %v116 = vld [vmem:[#allocation5 + $0x8] sm:$0xff]
    %v117 = vld [vmem:[#allocation5 + $0x10] sm:$0xff]
    %v118 = vld [vmem:[#allocation5 + $0x18] sm:$0xff]
    %v119 = vld [vmem:[#allocation5 + $0x20] sm:$0xff]
    %v120 = vld [vmem:[#allocation5 + $0x28] sm:$0xff]
    %v121 = vld [vmem:[#allocation5 + $0x30] sm:$0xff]
    %v122 = vld [vmem:[#allocation5 + $0x38] sm:$0xff]
    %v123 = vld [vmem:[#allocation5 + $0x40] sm:$0xff]
    %v124 = vld [vmem:[#allocation5 + $0x48] sm:$0xff]
    %v125 = vld [vmem:[#allocation5 + $0x50] sm:$0xff]
    %v126 = vld [vmem:[#allocation5 + $0x58] sm:$0xff]
    %v127 = vld [vmem:[#allocation5 + $0x60] sm:$0xff]
    %v128 = vld [vmem:[#allocation5 + $0x68] sm:$0xff]
    %v129 = vld [vmem:[#allocation5 + $0x70] sm:$0xff]
    %v130 = vld [vmem:[#allocation5 + $0x78] sm:$0xff]
    %v131 = vld [vmem:[#allocation5 + $0x80] sm:$0xff]
    %v132 = vld [vmem:[#allocation5 + $0x88] sm:$0xff]
    %v133 = vld [vmem:[#allocation5 + $0x90] sm:$0xff]
    %v134 = vld [vmem:[#allocation5 + $0x98] sm:$0xff]
    %v135 = vld [vmem:[#allocation5 + $0xa0] sm:$0xff]
    %v136 = vld [vmem:[#allocation5 + $0xa8] sm:$0xff]
    %v137 = vld [vmem:[#allocation5 + $0xb0] sm:$0xff]
    %v138 = vld [vmem:[#allocation5 + $0xb8] sm:$0xff]
    %v139 = vld [vmem:[#allocation5 + $0xc0] sm:$0xff]
    %v140 = vld [vmem:[#allocation5 + $0xc8] sm:$0xff]
    %v141 = vld [vmem:[#allocation5 + $0xd0] sm:$0xff]
    %v142 = vld [vmem:[#allocation5 + $0xd8] sm:$0xff]
    %v143 = vld [vmem:[#allocation5 + $0xe0] sm:$0xff]
    %v144 = vld [vmem:[#allocation5 + $0xe8] sm:$0xff]
    %v145 = vld [vmem:[#allocation5 + $0xf0] sm:$0xff]
    %v146 = vld [vmem:[#allocation5 + $0xf8] sm:$0xff]
    %v147 = vld [vmem:[#allocation5 + $0x100] sm:$0xff]
    %v148 = vld [vmem:[#allocation5 + $0x108] sm:$0xff]
    %v149 = vld [vmem:[#allocation5 + $0x110] sm:$0xff]
    %v150 = vld [vmem:[#allocation5 + $0x118] sm:$0xff]
    %v151 = vld [vmem:[#allocation5 + $0x120] sm:$0xff]
    %v152 = vld [vmem:[#allocation5 + $0x128] sm:$0xff]
    %v153 = vld [vmem:[#allocation5 + $0x130] sm:$0xff]
    %v154 = vld [vmem:[#allocation5 + $0x138] sm:$0xff]
    %v155 = vld [vmem:[#allocation5 + $0x140] sm:$0xff]
    %v156 = vld [vmem:[#allocation5 + $0x148] sm:$0xff]
    %v157 = vld [vmem:[#allocation5 + $0x150] sm:$0xff]
    %v158 = vld [vmem:[#allocation5 + $0x158] sm:$0xff]
    %v159 = vld [vmem:[#allocation5 + $0x160] sm:$0xff]
    %v160 = vld [vmem:[#allocation5 + $0x168] sm:$0xff]
    %v161 = vld [vmem:[#allocation5 + $0x170] sm:$0xff]
    %v162 = vld [vmem:[#allocation5 + $0x178] sm:$0xff]
    %v163 = vld [vmem:[#allocation5 + $0x180] sm:$0xff]
    %v164 = vld [vmem:[#allocation5 + $0x188] sm:$0xff]
    %v165 = vld [vmem:[#allocation5 + $0x190] sm:$0xff]
    %v166 = vld [vmem:[#allocation5 + $0x198] sm:$0xff]
    %v167 = vld [vmem:[#allocation5 + $0x1a0] sm:$0xff]
    %v168 = vld [vmem:[#allocation5 + $0x1a8] sm:$0xff]
    %v169 = vld [vmem:[#allocation5 + $0x1b0] sm:$0xff]
    %v170 = vld [vmem:[#allocation5 + $0x1b8] sm:$0xff]
    %v171 = vld [vmem:[#allocation5 + $0x1c0] sm:$0xff]
    %v172 = vld [vmem:[#allocation5 + $0x1c8] sm:$0xff]
    %v173 = vld [vmem:[#allocation5 + $0x1d0] sm:$0xff]
    %v174 = vld [vmem:[#allocation5 + $0x1d8] sm:$0xff]
    %v175 = vld [vmem:[#allocation5 + $0x1e0] sm:$0xff]
    %v176 = vld [vmem:[#allocation5 + $0x1e8] sm:$0xff]
    %v177 = vld [vmem:[#allocation5 + $0x1f0] sm:$0xff]
    %v178 = vld [vmem:[#allocation5 + $0x1f8] sm:$0xff]
    %v179 = vld [vmem:[#allocation5 + $0x200] sm:$0xff]
    %v180 = vld [vmem:[#allocation5 + $0x208] sm:$0xff]
    %v181 = vld [vmem:[#allocation5 + $0x210] sm:$0xff]
    %v182 = vld [vmem:[#allocation5 + $0x218] sm:$0xff]
    %v183 = vld [vmem:[#allocation5 + $0x220] sm:$0xff]
    %v184 = vld [vmem:[#allocation5 + $0x228] sm:$0xff]
    %v185 = vld [vmem:[#allocation5 + $0x230] sm:$0xff]
    %v186 = vld [vmem:[#allocation5 + $0x238] sm:$0xff]
    %v187 = vld [vmem:[#allocation5 + $0x240] sm:$0xff]
    %v188 = vld [vmem:[#allocation5 + $0x248] sm:$0xff]
    %v189 = vld [vmem:[#allocation5 + $0x250] sm:$0xff]
    %v190 = vld [vmem:[#allocation5 + $0x258] sm:$0xff]
    %v191 = vld [vmem:[#allocation5 + $0x260] sm:$0xff]
    %v192 = vld [vmem:[#allocation5 + $0x268] sm:$0xff]
    %v193 = vld [vmem:[#allocation5 + $0x270] sm:$0xff]
    %v194 = vld [vmem:[#allocation5 + $0x278] sm:$0xff]
    %v195 = vld [vmem:[#allocation5 + $0x280] sm:$0xff]
    %v196 = vld [vmem:[#allocation5 + $0x288] sm:$0xff]
    %v197 = vld [vmem:[#allocation5 + $0x290] sm:$0xff]
    %v198 = vld [vmem:[#allocation5 + $0x298] sm:$0xff]
    %v199 = vld [vmem:[#allocation5 + $0x2a0] sm:$0xff]
    %v200 = vld [vmem:[#allocation5 + $0x2a8] sm:$0xff]
    %v201 = vld [vmem:[#allocation5 + $0x2b0] sm:$0xff]
    %v202 = vld [vmem:[#allocation5 + $0x2b8] sm:$0xff]
    %v203 = vld [vmem:[#allocation5 + $0x2c0] sm:$0xff]
    %v204 = vld [vmem:[#allocation5 + $0x2c8] sm:$0xff]
    %v205 = vld [vmem:[#allocation5 + $0x2d0] sm:$0xff]
    %v206 = vld [vmem:[#allocation5 + $0x2d8] sm:$0xff]
    %v207 = vld [vmem:[#allocation5 + $0x2e0] sm:$0xff]
    %v208 = vld [vmem:[#allocation5 + $0x2e8] sm:$0xff]
    %v209 = vld [vmem:[#allocation5 + $0x2f0] sm:$0xff]
    %v210 = vld [vmem:[#allocation5 + $0x2f8] sm:$0xff]
    %v211 = vld [vmem:[#allocation5 + $0x300] sm:$0xff]
    %v212 = vld [vmem:[#allocation5 + $0x308] sm:$0xff]
    %v213 = vld [vmem:[#allocation5 + $0x310] sm:$0xff]
    %v214 = vld [vmem:[#allocation5 + $0x318] sm:$0xff]
    %v215 = vld [vmem:[#allocation5 + $0x320] sm:$0xff]
    %v216 = vld [vmem:[#allocation5 + $0x328] sm:$0xff]
    %v217 = vld [vmem:[#allocation5 + $0x330] sm:$0xff]
    %v218 = vld [vmem:[#allocation5 + $0x338] sm:$0xff]
    %v219 = vld [vmem:[#allocation5 + $0x340] sm:$0xff]
    %v220 = vld [vmem:[#allocation5 + $0x348] sm:$0xff]
    %v221 = vld [vmem:[#allocation5 + $0x350] sm:$0xff]
    %v222 = vld [vmem:[#allocation5 + $0x358] sm:$0xff]
    %v223 = vld [vmem:[#allocation5 + $0x360] sm:$0xff]
    %v224 = vld [vmem:[#allocation5 + $0x368] sm:$0xff]
    %v225 = vld [vmem:[#allocation5 + $0x370] sm:$0xff]
    %v226 = vld [vmem:[#allocation5 + $0x378] sm:$0xff]
    %v227 = vld [vmem:[#allocation5 + $0x380] sm:$0xff]
    %v228 = vld [vmem:[#allocation5 + $0x388] sm:$0xff]
    %v229 = vld [vmem:[#allocation5 + $0x390] sm:$0xff]
    %v230 = vld [vmem:[#allocation5 + $0x398] sm:$0xff]
    %v231 = vld [vmem:[#allocation5 + $0x3a0] sm:$0xff]
    %v232 = vld [vmem:[#allocation5 + $0x3a8] sm:$0xff]
    %v233 = vld [vmem:[#allocation5 + $0x3b0] sm:$0xff]
    %v234 = vld [vmem:[#allocation5 + $0x3b8] sm:$0xff]
    %v235 = vld [vmem:[#allocation5 + $0x3c0] sm:$0xff]
    %v236 = vld [vmem:[#allocation5 + $0x3c8] sm:$0xff]
    %v237 = vld [vmem:[#allocation5 + $0x3d0] sm:$0xff]
    %v238 = vld [vmem:[#allocation5 + $0x3d8] sm:$0xff]
    %v239 = vld [vmem:[#allocation5 + $0x3e0] sm:$0xff]
    %v240 = vld [vmem:[#allocation5 + $0x3e8] sm:$0xff]
    %v241 = vld [vmem:[#allocation5 + $0x3f0] sm:$0xff]
    %v242 = vld [vmem:[#allocation5 + $0x3f8] sm:$0xff]
    %v243 = vld [vmem:[#allocation5 + $0x400] sm:$0xff]
    %v244 = vld [vmem:[#allocation5 + $0x408] sm:$0xff]
    %v245 = vld [vmem:[#allocation5 + $0x410] sm:$0xff]
    %v246 = vld [vmem:[#allocation5 + $0x418] sm:$0xff]
    %v247 = vld [vmem:[#allocation5 + $0x420] sm:$0xff]
    %v248 = vld [vmem:[#allocation5 + $0x428] sm:$0xff]
    %v249 = vld [vmem:[#allocation5 + $0x430] sm:$0xff]
    %v250 = vld [vmem:[#allocation5 + $0x438] sm:$0xff]
    %v251 = vld [vmem:[#allocation5 + $0x440] sm:$0xff]
    %v252 = vld [vmem:[#allocation5 + $0x448] sm:$0xff]
    %v253 = vld [vmem:[#allocation5 + $0x450] sm:$0xff]
    %v254 = vld [vmem:[#allocation5 + $0x458] sm:$0xff]
    %v255 = vld [vmem:[#allocation5 + $0x460] sm:$0xff]
    %v256 = vld [vmem:[#allocation5 + $0x468] sm:$0xff]
    %v257 = vld [vmem:[#allocation5 + $0x470] sm:$0xff]
    %v258 = vld [vmem:[#allocation5 + $0x478] sm:$0xff]
    %v259 = vld [vmem:[#allocation5 + $0x480] sm:$0xff]
    %v260 = vld [vmem:[#allocation5 + $0x488] sm:$0xff]
    %v261 = vld [vmem:[#allocation5 + $0x490] sm:$0xff]
    %v262 = vld [vmem:[#allocation5 + $0x498] sm:$0xff]
    %v263 = vld [vmem:[#allocation5 + $0x4a0] sm:$0xff]
    %v264 = vld [vmem:[#allocation5 + $0x4a8] sm:$0xff]
    %v265 = vld [vmem:[#allocation5 + $0x4b0] sm:$0xff]
    %v266 = vld [vmem:[#allocation5 + $0x4b8] sm:$0xff]
    %v267 = vld [vmem:[#allocation5 + $0x4c0] sm:$0xff]
    %v268 = vld [vmem:[#allocation5 + $0x4c8] sm:$0xff]
    %v269 = vld [vmem:[#allocation5 + $0x4d0] sm:$0xff]
    %v270 = vld [vmem:[#allocation5 + $0x4d8] sm:$0xff]
    %v271 = vld [vmem:[#allocation5 + $0x4e0] sm:$0xff]
    %v272 = vld [vmem:[#allocation5 + $0x4e8] sm:$0xff]
    %v273 = vld [vmem:[#allocation5 + $0x4f0] sm:$0xff]
    %v274 = vld [vmem:[#allocation5 + $0x4f8] sm:$0xff]
    %v275 = vld [vmem:[#allocation5 + $0x500] sm:$0xff]
    %v276 = vld [vmem:[#allocation5 + $0x508] sm:$0xff]
    %v277 = vld [vmem:[#allocation5 + $0x510] sm:$0xff]
    %v278 = vld [vmem:[#allocation5 + $0x518] sm:$0xff]
    %v279 = vld [vmem:[#allocation5 + $0x520] sm:$0xff]
    %v280 = vld [vmem:[#allocation5 + $0x528] sm:$0xff]
    %v281 = vld [vmem:[#allocation5 + $0x530] sm:$0xff]
    %v282 = vld [vmem:[#allocation5 + $0x538] sm:$0xff]
    %v283 = vld [vmem:[#allocation5 + $0x540] sm:$0xff]
    %v284 = vld [vmem:[#allocation5 + $0x548] sm:$0xff]
    %v285 = vld [vmem:[#allocation5 + $0x550] sm:$0xff]
    %v286 = vld [vmem:[#allocation5 + $0x558] sm:$0xff]
    %v287 = vld [vmem:[#allocation5 + $0x560] sm:$0xff]
    %v288 = vld [vmem:[#allocation5 + $0x568] sm:$0xff]
    %v289 = vld [vmem:[#allocation5 + $0x570] sm:$0xff]
    %v290 = vld [vmem:[#allocation5 + $0x578] sm:$0xff]
    %v291 = vld [vmem:[#allocation5 + $0x580] sm:$0xff]
    %v292 = vld [vmem:[#allocation5 + $0x588] sm:$0xff]
    %v293 = vld [vmem:[#allocation5 + $0x590] sm:$0xff]
    %v294 = vld [vmem:[#allocation5 + $0x598] sm:$0xff]
    %v295 = vld [vmem:[#allocation5 + $0x5a0] sm:$0xff]
    %v296 = vld [vmem:[#allocation5 + $0x5a8] sm:$0xff]
    %v297 = vld [vmem:[#allocation5 + $0x5b0] sm:$0xff]
    %v298 = vld [vmem:[#allocation5 + $0x5b8] sm:$0xff]
    %v299 = vld [vmem:[#allocation5 + $0x5c0] sm:$0xff]
    %v300 = vld [vmem:[#allocation5 + $0x5c8] sm:$0xff]
    %v301 = vld [vmem:[#allocation5 + $0x5d0] sm:$0xff]
    %v302 = vld [vmem:[#allocation5 + $0x5d8] sm:$0xff]
    %v303 = vld [vmem:[#allocation5 + $0x5e0] sm:$0xff]
    %v304 = vld [vmem:[#allocation5 + $0x5e8] sm:$0xff]
    %v305 = vld [vmem:[#allocation5 + $0x5f0] sm:$0xff]
    %v306 = vld [vmem:[#allocation5 + $0x5f8] sm:$0xff]
    %v307 = vld [vmem:[#allocation5 + $0x600] sm:$0xff]
    %v308 = vld [vmem:[#allocation5 + $0x608] sm:$0xff]
    %v309 = vld [vmem:[#allocation5 + $0x610] sm:$0xff]
    %v310 = vld [vmem:[#allocation5 + $0x618] sm:$0xff]
    %v311 = vld [vmem:[#allocation5 + $0x620] sm:$0xff]
    %v312 = vld [vmem:[#allocation5 + $0x628] sm:$0xff]
    %v313 = vld [vmem:[#allocation5 + $0x630] sm:$0xff]
    %v314 = vld [vmem:[#allocation5 + $0x638] sm:$0xff]
    %v315 = vld [vmem:[#allocation5 + $0x640] sm:$0xff]
    %v316 = vld [vmem:[#allocation5 + $0x648] sm:$0xff]
    %v317 = vld [vmem:[#allocation5 + $0x650] sm:$0xff]
    %v318 = vld [vmem:[#allocation5 + $0x658] sm:$0xff]
    %v319 = vld [vmem:[#allocation5 + $0x660] sm:$0xff]
    %v320 = vld [vmem:[#allocation5 + $0x668] sm:$0xff]
    %v321 = vld [vmem:[#allocation5 + $0x670] sm:$0xff]
    %v322 = vld [vmem:[#allocation5 + $0x678] sm:$0xff]
    %v323 = vld [vmem:[#allocation5 + $0x680] sm:$0xff]
    %v324 = vld [vmem:[#allocation5 + $0x688] sm:$0xff]
    %v325 = vld [vmem:[#allocation5 + $0x690] sm:$0xff]
    %v326 = vld [vmem:[#allocation5 + $0x698] sm:$0xff]
    %v327 = vld [vmem:[#allocation5 + $0x6a0] sm:$0xff]
    %v328 = vld [vmem:[#allocation5 + $0x6a8] sm:$0xff]
    %v329 = vld [vmem:[#allocation5 + $0x6b0] sm:$0xff]
    %v330 = vld [vmem:[#allocation5 + $0x6b8] sm:$0xff]
    %v331 = vld [vmem:[#allocation5 + $0x6c0] sm:$0xff]
    %v332 = vld [vmem:[#allocation5 + $0x6c8] sm:$0xff]
    %v333 = vld [vmem:[#allocation5 + $0x6d0] sm:$0xff]
    %v334 = vld [vmem:[#allocation5 + $0x6d8] sm:$0xff]
    %v335 = vld [vmem:[#allocation5 + $0x6e0] sm:$0xff]
    %v336 = vld [vmem:[#allocation5 + $0x6e8] sm:$0xff]
    %v337 = vld [vmem:[#allocation5 + $0x6f0] sm:$0xff]
    %v338 = vld [vmem:[#allocation5 + $0x6f8] sm:$0xff]
    %v339 = vld [vmem:[#allocation5 + $0x700] sm:$0xff]
    %v340 = vld [vmem:[#allocation5 + $0x708] sm:$0xff]
    %v341 = vld [vmem:[#allocation5 + $0x710] sm:$0xff]
    %v342 = vld [vmem:[#allocation5 + $0x718] sm:$0xff]
    %v343 = vld [vmem:[#allocation5 + $0x720] sm:$0xff]
    %v344 = vld [vmem:[#allocation5 + $0x728] sm:$0xff]
    %v345 = vld [vmem:[#allocation5 + $0x730] sm:$0xff]
    %v346 = vld [vmem:[#allocation5 + $0x738] sm:$0xff]
    %v347 = vld [vmem:[#allocation5 + $0x740] sm:$0xff]
    %v348 = vld [vmem:[#allocation5 + $0x748] sm:$0xff]
    %v349 = vld [vmem:[#allocation5 + $0x750] sm:$0xff]
    %v350 = vld [vmem:[#allocation5 + $0x758] sm:$0xff]
    %v351 = vld [vmem:[#allocation5 + $0x760] sm:$0xff]
    %v352 = vld [vmem:[#allocation5 + $0x768] sm:$0xff]
    %v353 = vld [vmem:[#allocation5 + $0x770] sm:$0xff]
    %v354 = vld [vmem:[#allocation5 + $0x778] sm:$0xff]
    %v355 = vld [vmem:[#allocation5 + $0x780] sm:$0xff]
    %v356 = vld [vmem:[#allocation5 + $0x788] sm:$0xff]
    %v357 = vld [vmem:[#allocation5 + $0x790] sm:$0xff]
    %v358 = vld [vmem:[#allocation5 + $0x798] sm:$0xff]
    %v359 = vld [vmem:[#allocation5 + $0x7a0] sm:$0xff]
    %v360 = vld [vmem:[#allocation5 + $0x7a8] sm:$0xff]
    %v361 = vld [vmem:[#allocation5 + $0x7b0] sm:$0xff]
    %v362 = vld [vmem:[#allocation5 + $0x7b8] sm:$0xff]
    %v363 = vld [vmem:[#allocation5 + $0x7c0] sm:$0xff]
    %v364 = vld [vmem:[#allocation5 + $0x7c8] sm:$0xff]
    %v365 = vld [vmem:[#allocation5 + $0x7d0] sm:$0xff]
    %v366 = vld [vmem:[#allocation5 + $0x7d8] sm:$0xff]
    %v367 = vld [vmem:[#allocation5 + $0x7e0] sm:$0xff]
    %v368 = vld [vmem:[#allocation5 + $0x7e8] sm:$0xff]
    %v369 = vld [vmem:[#allocation5 + $0x7f0] sm:$0xff]
    %v370 = vld [vmem:[#allocation5 + $0x7f8] sm:$0xff]
    %v371 = vld [vmem:[#allocation5 + $0x800] sm:$0xff]
    %v372 = vld [vmem:[#allocation5 + $0x808] sm:$0xff]
    %v373 = vld [vmem:[#allocation5 + $0x810] sm:$0xff]
    %v374 = vld [vmem:[#allocation5 + $0x818] sm:$0xff]
    %v375 = vld [vmem:[#allocation5 + $0x820] sm:$0xff]
    %v376 = vld [vmem:[#allocation5 + $0x828] sm:$0xff]
    %v377 = vld [vmem:[#allocation5 + $0x830] sm:$0xff]
    %v378 = vld [vmem:[#allocation5 + $0x838] sm:$0xff]
    %v379 = vld [vmem:[#allocation5 + $0x840] sm:$0xff]
    %v380 = vld [vmem:[#allocation5 + $0x848] sm:$0xff]
    %v381 = vld [vmem:[#allocation5 + $0x850] sm:$0xff]
    %v382 = vld [vmem:[#allocation5 + $0x858] sm:$0xff]
    %v383 = vld [vmem:[#allocation5 + $0x860] sm:$0xff]
    %v384 = vld [vmem:[#allocation5 + $0x868] sm:$0xff]
    %v385 = vld [vmem:[#allocation5 + $0x870] sm:$0xff]
    %v386 = vld [vmem:[#allocation5 + $0x878] sm:$0xff]
    %v387 = vld [vmem:[#allocation5 + $0x880] sm:$0xff]
    %v388 = vld [vmem:[#allocation5 + $0x888] sm:$0xff]
    %v389 = vld [vmem:[#allocation5 + $0x890] sm:$0xff]
    %v390 = vld [vmem:[#allocation5 + $0x898] sm:$0xff]
    %v391 = vld [vmem:[#allocation5 + $0x8a0] sm:$0xff]
    %v392 = vld [vmem:[#allocation5 + $0x8a8] sm:$0xff]
    %v393 = vld [vmem:[#allocation5 + $0x8b0] sm:$0xff]
    %v394 = vld [vmem:[#allocation5 + $0x8b8] sm:$0xff]
    %v395 = vld [vmem:[#allocation5 + $0x8c0] sm:$0xff]
    %v396 = vld [vmem:[#allocation5 + $0x8c8] sm:$0xff]
    %v397 = vld [vmem:[#allocation5 + $0x8d0] sm:$0xff]
    %v398 = vld [vmem:[#allocation5 + $0x8d8] sm:$0xff]
    %v399 = vld [vmem:[#allocation5 + $0x8e0] sm:$0xff]
    %v400 = vld [vmem:[#allocation5 + $0x8e8] sm:$0xff]
    %v401 = vld [vmem:[#allocation5 + $0x8f0] sm:$0xff]
    %v402 = vld [vmem:[#allocation5 + $0x8f8] sm:$0xff]
    %v403 = vld [vmem:[#allocation5 + $0x900] sm:$0xff]
    %v404 = vld [vmem:[#allocation5 + $0x908] sm:$0xff]
    %v405 = vld [vmem:[#allocation5 + $0x910] sm:$0xff]
    %v406 = vld [vmem:[#allocation5 + $0x918] sm:$0xff]
    %v407 = vld [vmem:[#allocation5 + $0x920] sm:$0xff]
    %v408 = vld [vmem:[#allocation5 + $0x928] sm:$0xff]
    %v409 = vld [vmem:[#allocation5 + $0x930] sm:$0xff]
    %v410 = vld [vmem:[#allocation5 + $0x938] sm:$0xff]
    %v411 = vld [vmem:[#allocation5 + $0x940] sm:$0xff]
    %v412 = vld [vmem:[#allocation5 + $0x948] sm:$0xff]
    %v413 = vld [vmem:[#allocation5 + $0x950] sm:$0xff]
    %v414 = vld [vmem:[#allocation5 + $0x958] sm:$0xff]
    %v415 = vld [vmem:[#allocation5 + $0x960] sm:$0xff]
    %v416 = vld [vmem:[#allocation5 + $0x968] sm:$0xff]
    %v417 = vld [vmem:[#allocation5 + $0x970] sm:$0xff]
    %v418 = vld [vmem:[#allocation5 + $0x978] sm:$0xff]
    %v419 = vld [vmem:[#allocation5 + $0x980] sm:$0xff]
    %v420 = vld [vmem:[#allocation5 + $0x988] sm:$0xff]
    %v421 = vld [vmem:[#allocation5 + $0x990] sm:$0xff]
    %v422 = vld [vmem:[#allocation5 + $0x998] sm:$0xff]
    %v423 = vld [vmem:[#allocation5 + $0x9a0] sm:$0xff]
    %v424 = vld [vmem:[#allocation5 + $0x9a8] sm:$0xff]
    %v425 = vld [vmem:[#allocation5 + $0x9b0] sm:$0xff]
    %v426 = vld [vmem:[#allocation5 + $0x9b8] sm:$0xff]
    %v427 = vld [vmem:[#allocation5 + $0x9c0] sm:$0xff]
    %v428 = vld [vmem:[#allocation5 + $0x9c8] sm:$0xff]
    %v429 = vld [vmem:[#allocation5 + $0x9d0] sm:$0xff]
    %v430 = vld [vmem:[#allocation5 + $0x9d8] sm:$0xff]
    %v431 = vld [vmem:[#allocation5 + $0x9e0] sm:$0xff]
    %v432 = vld [vmem:[#allocation5 + $0x9e8] sm:$0xff]
    %v433 = vld [vmem:[#allocation5 + $0x9f0] sm:$0xff]
    %v434 = vld [vmem:[#allocation5 + $0x9f8] sm:$0xff]
    %v435 = vld [vmem:[#allocation5 + $0xa00] sm:$0xff]
    %v436 = vld [vmem:[#allocation5 + $0xa08] sm:$0xff]
    %v437 = vld [vmem:[#allocation5 + $0xa10] sm:$0xff]
    %v438 = vld [vmem:[#allocation5 + $0xa18] sm:$0xff]
    %v439 = vld [vmem:[#allocation5 + $0xa20] sm:$0xff]
    %v440 = vld [vmem:[#allocation5 + $0xa28] sm:$0xff]
    %v441 = vld [vmem:[#allocation5 + $0xa30] sm:$0xff]
    %v442 = vld [vmem:[#allocation5 + $0xa38] sm:$0xff]
    %v443 = vld [vmem:[#allocation5 + $0xa40] sm:$0xff]
    %v444 = vld [vmem:[#allocation5 + $0xa48] sm:$0xff]
    %v445 = vld [vmem:[#allocation5 + $0xa50] sm:$0xff]
    %v446 = vld [vmem:[#allocation5 + $0xa58] sm:$0xff]
    %v447 = vld [vmem:[#allocation5 + $0xa60] sm:$0xff]
    %v448 = vld [vmem:[#allocation5 + $0xa68] sm:$0xff]
    %v449 = vld [vmem:[#allocation5 + $0xa70] sm:$0xff]
    %v450 = vld [vmem:[#allocation5 + $0xa78] sm:$0xff]
    %v451 = vld [vmem:[#allocation5 + $0xa80] sm:$0xff]
    %v452 = vld [vmem:[#allocation5 + $0xa88] sm:$0xff]
    %v453 = vld [vmem:[#allocation5 + $0xa90] sm:$0xff]
    %v454 = vld [vmem:[#allocation5 + $0xa98] sm:$0xff]
    %v455 = vld [vmem:[#allocation5 + $0xaa0] sm:$0xff]
    %v456 = vld [vmem:[#allocation5 + $0xaa8] sm:$0xff]
    %v457 = vld [vmem:[#allocation5 + $0xab0] sm:$0xff]
    %v458 = vld [vmem:[#allocation5 + $0xab8] sm:$0xff]
    %v459 = vld [vmem:[#allocation5 + $0xac0] sm:$0xff]
    %v460 = vld [vmem:[#allocation5 + $0xac8] sm:$0xff]
    %v461 = vld [vmem:[#allocation5 + $0xad0] sm:$0xff]
    %v462 = vld [vmem:[#allocation5 + $0xad8] sm:$0xff]
    %v463 = vld [vmem:[#allocation5 + $0xae0] sm:$0xff]
    %v464 = vld [vmem:[#allocation5 + $0xae8] sm:$0xff]
    %v465 = vld [vmem:[#allocation5 + $0xaf0] sm:$0xff]
    %v466 = vld [vmem:[#allocation5 + $0xaf8] sm:$0xff]
    %v467 = vld [vmem:[#allocation5 + $0xb00] sm:$0xff]
    %v468 = vld [vmem:[#allocation5 + $0xb08] sm:$0xff]
    %v469 = vld [vmem:[#allocation5 + $0xb10] sm:$0xff]
    %v470 = vld [vmem:[#allocation5 + $0xb18] sm:$0xff]
    %v471 = vld [vmem:[#allocation5 + $0xb20] sm:$0xff]
    %v472 = vld [vmem:[#allocation5 + $0xb28] sm:$0xff]
    %v473 = vld [vmem:[#allocation5 + $0xb30] sm:$0xff]
    %v474 = vld [vmem:[#allocation5 + $0xb38] sm:$0xff]
    %v475 = vld [vmem:[#allocation5 + $0xb40] sm:$0xff]
    %v476 = vld [vmem:[#allocation5 + $0xb48] sm:$0xff]
    %v477 = vld [vmem:[#allocation5 + $0xb50] sm:$0xff]
    %v478 = vld [vmem:[#allocation5 + $0xb58] sm:$0xff]
    %v479 = vld [vmem:[#allocation5 + $0xb60] sm:$0xff]
    %v480 = vld [vmem:[#allocation5 + $0xb68] sm:$0xff]
    %v481 = vld [vmem:[#allocation5 + $0xb70] sm:$0xff]
    %v482 = vld [vmem:[#allocation5 + $0xb78] sm:$0xff]
    %v483 = vld [vmem:[#allocation5 + $0xb80] sm:$0xff]
    %v484 = vld [vmem:[#allocation5 + $0xb88] sm:$0xff]
    %v485 = vld [vmem:[#allocation5 + $0xb90] sm:$0xff]
    %v486 = vld [vmem:[#allocation5 + $0xb98] sm:$0xff]
    %v487 = vld [vmem:[#allocation5 + $0xba0] sm:$0xff]
    %v488 = vld [vmem:[#allocation5 + $0xba8] sm:$0xff]
    %v489 = vld [vmem:[#allocation5 + $0xbb0] sm:$0xff]
    %v490 = vld [vmem:[#allocation5 + $0xbb8] sm:$0xff]
    %v491 = vld [vmem:[#allocation5 + $0xbc0] sm:$0xff]
    %v492 = vld [vmem:[#allocation5 + $0xbc8] sm:$0xff]
    %v493 = vld [vmem:[#allocation5 + $0xbd0] sm:$0xff]
    %v494 = vld [vmem:[#allocation5 + $0xbd8] sm:$0xff]
    %v495 = vld [vmem:[#allocation5 + $0xbe0] sm:$0xff]
    %v496 = vld [vmem:[#allocation5 + $0xbe8] sm:$0xff]
    %v497 = vld [vmem:[#allocation5 + $0xbf0] sm:$0xff]
    %v498 = vld [vmem:[#allocation5 + $0xbf8] sm:$0xff]
    %v499 = vld [vmem:[#allocation7] sm:$0xff]
    %v501 = vlaneseq
    %v502 = vshrl.u32 %v501, 7
    %v503 = vsub.s32 0, %v502
    %v504 = vrot.slane %v499, %v503
    %v505 = vlaneseq
    %v506 = vshrl.u32 %v505, 7
    %v507 = vsub.s32 1, %v506
    %v508 = vrot.slane %v499, %v507
    %v509 = vlaneseq
    %v510 = vshrl.u32 %v509, 7
    %v511 = vsub.s32 2, %v510
    %v512 = vrot.slane %v499, %v511
    %v513 = vlaneseq
    %v514 = vshrl.u32 %v513, 7
    %v515 = vsub.s32 3, %v514
    %v516 = vrot.slane %v499, %v515
    %v517 = vlaneseq
    %v518 = vshrl.u32 %v517, 7
    %v519 = vsub.s32 4, %v518
    %v520 = vrot.slane %v499, %v519
    %v521 = vlaneseq
    %v522 = vshrl.u32 %v521, 7
    %v523 = vsub.s32 5, %v522
    %v524 = vrot.slane %v499, %v523
    %v525 = vlaneseq
    %v526 = vshrl.u32 %v525, 7
    %v527 = vsub.s32 6, %v526
    %v528 = vrot.slane %v499, %v527
    %v529 = vlaneseq
    %v530 = vshrl.u32 %v529, 7
    %v531 = vsub.s32 7, %v530
    %v532 = vrot.slane %v499, %v531
    %v925 = vunpack.c.l.b16 %v115
    %v926 = vunpack.c.h.b16 %v115
    %v927 = vunpack.c.l.b16 %v116
    %v928 = vunpack.c.h.b16 %v116
    %v929 = vunpack.c.l.b16 %v117
    %v930 = vunpack.c.h.b16 %v117
    %v931 = vunpack.c.l.b16 %v118
    %v932 = vunpack.c.h.b16 %v118
    %v933 = vunpack.c.l.b16 %v119
    %v934 = vunpack.c.h.b16 %v119
    %v935 = vunpack.c.l.b16 %v120
    %v936 = vunpack.c.h.b16 %v120
    %v937 = vunpack.c.l.b16 %v121
    %v938 = vunpack.c.h.b16 %v121
    %v939 = vunpack.c.l.b16 %v122
    %v940 = vunpack.c.h.b16 %v122
    %v941 = vunpack.c.l.b16 %v123
    %v942 = vunpack.c.h.b16 %v123
    %v943 = vunpack.c.l.b16 %v124
    %v944 = vunpack.c.h.b16 %v124
    %v945 = vunpack.c.l.b16 %v125
    %v946 = vunpack.c.h.b16 %v125
    %v947 = vunpack.c.l.b16 %v126
    %v948 = vunpack.c.h.b16 %v126
    %v949 = vunpack.c.l.b16 %v127
    %v950 = vunpack.c.h.b16 %v127
    %v951 = vunpack.c.l.b16 %v128
    %v952 = vunpack.c.h.b16 %v128
    %v953 = vunpack.c.l.b16 %v129
    %v954 = vunpack.c.h.b16 %v129
    %v955 = vunpack.c.l.b16 %v130
    %v956 = vunpack.c.h.b16 %v130
    %v957 = vunpack.c.l.b16 %v131
    %v958 = vunpack.c.h.b16 %v131
    %v959 = vunpack.c.l.b16 %v132
    %v960 = vunpack.c.h.b16 %v132
    %v961 = vunpack.c.l.b16 %v133
    %v962 = vunpack.c.h.b16 %v133
    %v963 = vunpack.c.l.b16 %v134
    %v964 = vunpack.c.h.b16 %v134
    %v965 = vunpack.c.l.b16 %v135
    %v966 = vunpack.c.h.b16 %v135
    %v967 = vunpack.c.l.b16 %v136
    %v968 = vunpack.c.h.b16 %v136
    %v969 = vunpack.c.l.b16 %v137
    %v970 = vunpack.c.h.b16 %v137
    %v971 = vunpack.c.l.b16 %v138
    %v972 = vunpack.c.h.b16 %v138
    %v973 = vunpack.c.l.b16 %v139
    %v974 = vunpack.c.h.b16 %v139
    %v975 = vunpack.c.l.b16 %v140
    %v976 = vunpack.c.h.b16 %v140
    %v977 = vunpack.c.l.b16 %v141
    %v978 = vunpack.c.h.b16 %v141
    %v979 = vunpack.c.l.b16 %v142
    %v980 = vunpack.c.h.b16 %v142
    %v981 = vunpack.c.l.b16 %v143
    %v982 = vunpack.c.h.b16 %v143
    %v983 = vunpack.c.l.b16 %v144
    %v984 = vunpack.c.h.b16 %v144
    %v985 = vunpack.c.l.b16 %v145
    %v986 = vunpack.c.h.b16 %v145
    %v987 = vunpack.c.l.b16 %v146
    %v988 = vunpack.c.h.b16 %v146
    %v989 = vunpack.c.l.b16 %v147
    %v990 = vunpack.c.h.b16 %v147
    %v991 = vunpack.c.l.b16 %v148
    %v992 = vunpack.c.h.b16 %v148
    %v993 = vunpack.c.l.b16 %v149
    %v994 = vunpack.c.h.b16 %v149
    %v995 = vunpack.c.l.b16 %v150
    %v996 = vunpack.c.h.b16 %v150
    %v997 = vunpack.c.l.b16 %v151
    %v998 = vunpack.c.h.b16 %v151
    %v999 = vunpack.c.l.b16 %v152
    %v1000 = vunpack.c.h.b16 %v152
    %v1001 = vunpack.c.l.b16 %v153
    %v1002 = vunpack.c.h.b16 %v153
    %v1003 = vunpack.c.l.b16 %v154
    %v1004 = vunpack.c.h.b16 %v154
    %v1005 = vunpack.c.l.b16 %v155
    %v1006 = vunpack.c.h.b16 %v155
    %v1007 = vunpack.c.l.b16 %v156
    %v1008 = vunpack.c.h.b16 %v156
    %v1009 = vunpack.c.l.b16 %v157
    %v1010 = vunpack.c.h.b16 %v157
    %v1011 = vunpack.c.l.b16 %v158
    %v1012 = vunpack.c.h.b16 %v158
    %v1013 = vunpack.c.l.b16 %v159
    %v1014 = vunpack.c.h.b16 %v159
    %v1015 = vunpack.c.l.b16 %v160
    %v1016 = vunpack.c.h.b16 %v160
    %v1017 = vunpack.c.l.b16 %v161
    %v1018 = vunpack.c.h.b16 %v161
    %v1019 = vunpack.c.l.b16 %v162
    %v1020 = vunpack.c.h.b16 %v162
    %v1021 = vunpack.c.l.b16 %v163
    %v1022 = vunpack.c.h.b16 %v163
    %v1023 = vunpack.c.l.b16 %v164
    %v1024 = vunpack.c.h.b16 %v164
    %v1025 = vunpack.c.l.b16 %v165
    %v1026 = vunpack.c.h.b16 %v165
    %v1027 = vunpack.c.l.b16 %v166
    %v1028 = vunpack.c.h.b16 %v166
    %v1029 = vunpack.c.l.b16 %v167
    %v1030 = vunpack.c.h.b16 %v167
    %v1031 = vunpack.c.l.b16 %v168
    %v1032 = vunpack.c.h.b16 %v168
    %v1033 = vunpack.c.l.b16 %v169
    %v1034 = vunpack.c.h.b16 %v169
    %v1035 = vunpack.c.l.b16 %v170
    %v1036 = vunpack.c.h.b16 %v170
    %v1037 = vunpack.c.l.b16 %v171
    %v1038 = vunpack.c.h.b16 %v171
    %v1039 = vunpack.c.l.b16 %v172
    %v1040 = vunpack.c.h.b16 %v172
    %v1041 = vunpack.c.l.b16 %v173
    %v1042 = vunpack.c.h.b16 %v173
    %v1043 = vunpack.c.l.b16 %v174
    %v1044 = vunpack.c.h.b16 %v174
    %v1045 = vunpack.c.l.b16 %v175
    %v1046 = vunpack.c.h.b16 %v175
    %v1047 = vunpack.c.l.b16 %v176
    %v1048 = vunpack.c.h.b16 %v176
    %v1049 = vunpack.c.l.b16 %v177
    %v1050 = vunpack.c.h.b16 %v177
    %v1051 = vunpack.c.l.b16 %v178
    %v1052 = vunpack.c.h.b16 %v178
    %v1053 = vunpack.c.l.b16 %v179
    %v1054 = vunpack.c.h.b16 %v179
    %v1055 = vunpack.c.l.b16 %v180
    %v1056 = vunpack.c.h.b16 %v180
    %v1057 = vunpack.c.l.b16 %v181
    %v1058 = vunpack.c.h.b16 %v181
    %v1059 = vunpack.c.l.b16 %v182
    %v1060 = vunpack.c.h.b16 %v182
    %v1061 = vunpack.c.l.b16 %v183
    %v1062 = vunpack.c.h.b16 %v183
    %v1063 = vunpack.c.l.b16 %v184
    %v1064 = vunpack.c.h.b16 %v184
    %v1065 = vunpack.c.l.b16 %v185
    %v1066 = vunpack.c.h.b16 %v185
    %v1067 = vunpack.c.l.b16 %v186
    %v1068 = vunpack.c.h.b16 %v186
    %v1069 = vunpack.c.l.b16 %v187
    %v1070 = vunpack.c.h.b16 %v187
    %v1071 = vunpack.c.l.b16 %v188
    %v1072 = vunpack.c.h.b16 %v188
    %v1073 = vunpack.c.l.b16 %v189
    %v1074 = vunpack.c.h.b16 %v189
    %v1075 = vunpack.c.l.b16 %v190
    %v1076 = vunpack.c.h.b16 %v190
    %v1077 = vunpack.c.l.b16 %v191
    %v1078 = vunpack.c.h.b16 %v191
    %v1079 = vunpack.c.l.b16 %v192
    %v1080 = vunpack.c.h.b16 %v192
    %v1081 = vunpack.c.l.b16 %v193
    %v1082 = vunpack.c.h.b16 %v193
    %v1083 = vunpack.c.l.b16 %v194
    %v1084 = vunpack.c.h.b16 %v194
    %v1085 = vunpack.c.l.b16 %v195
    %v1086 = vunpack.c.h.b16 %v195
    %v1087 = vunpack.c.l.b16 %v196
    %v1088 = vunpack.c.h.b16 %v196
    %v1089 = vunpack.c.l.b16 %v197
    %v1090 = vunpack.c.h.b16 %v197
    %v1091 = vunpack.c.l.b16 %v198
    %v1092 = vunpack.c.h.b16 %v198
    %v1093 = vunpack.c.l.b16 %v199
    %v1094 = vunpack.c.h.b16 %v199
    %v1095 = vunpack.c.l.b16 %v200
    %v1096 = vunpack.c.h.b16 %v200
    %v1097 = vunpack.c.l.b16 %v201
    %v1098 = vunpack.c.h.b16 %v201
    %v1099 = vunpack.c.l.b16 %v202
    %v1100 = vunpack.c.h.b16 %v202
    %v1101 = vunpack.c.l.b16 %v203
    %v1102 = vunpack.c.h.b16 %v203
    %v1103 = vunpack.c.l.b16 %v204
    %v1104 = vunpack.c.h.b16 %v204
    %v1105 = vunpack.c.l.b16 %v205
    %v1106 = vunpack.c.h.b16 %v205
    %v1107 = vunpack.c.l.b16 %v206
    %v1108 = vunpack.c.h.b16 %v206
    %v1109 = vunpack.c.l.b16 %v207
    %v1110 = vunpack.c.h.b16 %v207
    %v1111 = vunpack.c.l.b16 %v208
    %v1112 = vunpack.c.h.b16 %v208
    %v1113 = vunpack.c.l.b16 %v209
    %v1114 = vunpack.c.h.b16 %v209
    %v1115 = vunpack.c.l.b16 %v210
    %v1116 = vunpack.c.h.b16 %v210
    %v1117 = vunpack.c.l.b16 %v211
    %v1118 = vunpack.c.h.b16 %v211
    %v1119 = vunpack.c.l.b16 %v212
    %v1120 = vunpack.c.h.b16 %v212
    %v1121 = vunpack.c.l.b16 %v213
    %v1122 = vunpack.c.h.b16 %v213
    %v1123 = vunpack.c.l.b16 %v214
    %v1124 = vunpack.c.h.b16 %v214
    %v1125 = vunpack.c.l.b16 %v215
    %v1126 = vunpack.c.h.b16 %v215
    %v1127 = vunpack.c.l.b16 %v216
    %v1128 = vunpack.c.h.b16 %v216
    %v1129 = vunpack.c.l.b16 %v217
    %v1130 = vunpack.c.h.b16 %v217
    %v1131 = vunpack.c.l.b16 %v218
    %v1132 = vunpack.c.h.b16 %v218
    %v1133 = vunpack.c.l.b16 %v219
    %v1134 = vunpack.c.h.b16 %v219
    %v1135 = vunpack.c.l.b16 %v220
    %v1136 = vunpack.c.h.b16 %v220
    %v1137 = vunpack.c.l.b16 %v221
    %v1138 = vunpack.c.h.b16 %v221
    %v1139 = vunpack.c.l.b16 %v222
    %v1140 = vunpack.c.h.b16 %v222
    %v1141 = vunpack.c.l.b16 %v223
    %v1142 = vunpack.c.h.b16 %v223
    %v1143 = vunpack.c.l.b16 %v224
    %v1144 = vunpack.c.h.b16 %v224
    %v1145 = vunpack.c.l.b16 %v225
    %v1146 = vunpack.c.h.b16 %v225
    %v1147 = vunpack.c.l.b16 %v226
    %v1148 = vunpack.c.h.b16 %v226
    %v1149 = vunpack.c.l.b16 %v227
    %v1150 = vunpack.c.h.b16 %v227
    %v1151 = vunpack.c.l.b16 %v228
    %v1152 = vunpack.c.h.b16 %v228
    %v1153 = vunpack.c.l.b16 %v229
    %v1154 = vunpack.c.h.b16 %v229
    %v1155 = vunpack.c.l.b16 %v230
    %v1156 = vunpack.c.h.b16 %v230
    %v1157 = vunpack.c.l.b16 %v231
    %v1158 = vunpack.c.h.b16 %v231
    %v1159 = vunpack.c.l.b16 %v232
    %v1160 = vunpack.c.h.b16 %v232
    %v1161 = vunpack.c.l.b16 %v233
    %v1162 = vunpack.c.h.b16 %v233
    %v1163 = vunpack.c.l.b16 %v234
    %v1164 = vunpack.c.h.b16 %v234
    %v1165 = vunpack.c.l.b16 %v235
    %v1166 = vunpack.c.h.b16 %v235
    %v1167 = vunpack.c.l.b16 %v236
    %v1168 = vunpack.c.h.b16 %v236
    %v1169 = vunpack.c.l.b16 %v237
    %v1170 = vunpack.c.h.b16 %v237
    %v1171 = vunpack.c.l.b16 %v238
    %v1172 = vunpack.c.h.b16 %v238
    %v1173 = vunpack.c.l.b16 %v239
    %v1174 = vunpack.c.h.b16 %v239
    %v1175 = vunpack.c.l.b16 %v240
    %v1176 = vunpack.c.h.b16 %v240
    %v1177 = vunpack.c.l.b16 %v241
    %v1178 = vunpack.c.h.b16 %v241
    %v1179 = vunpack.c.l.b16 %v242
    %v1180 = vunpack.c.h.b16 %v242
    %v1181 = vunpack.c.l.b16 %v243
    %v1182 = vunpack.c.h.b16 %v243
    %v1183 = vunpack.c.l.b16 %v244
    %v1184 = vunpack.c.h.b16 %v244
    %v1185 = vunpack.c.l.b16 %v245
    %v1186 = vunpack.c.h.b16 %v245
    %v1187 = vunpack.c.l.b16 %v246
    %v1188 = vunpack.c.h.b16 %v246
    %v1189 = vunpack.c.l.b16 %v247
    %v1190 = vunpack.c.h.b16 %v247
    %v1191 = vunpack.c.l.b16 %v248
    %v1192 = vunpack.c.h.b16 %v248
    %v1193 = vunpack.c.l.b16 %v249
    %v1194 = vunpack.c.h.b16 %v249
    %v1195 = vunpack.c.l.b16 %v250
    %v1196 = vunpack.c.h.b16 %v250
    %v1197 = vunpack.c.l.b16 %v251
    %v1198 = vunpack.c.h.b16 %v251
    %v1199 = vunpack.c.l.b16 %v252
    %v1200 = vunpack.c.h.b16 %v252
    %v1201 = vunpack.c.l.b16 %v253
    %v1202 = vunpack.c.h.b16 %v253
    %v1203 = vunpack.c.l.b16 %v254
    %v1204 = vunpack.c.h.b16 %v254
    %v1205 = vunpack.c.l.b16 %v255
    %v1206 = vunpack.c.h.b16 %v255
    %v1207 = vunpack.c.l.b16 %v256
    %v1208 = vunpack.c.h.b16 %v256
    %v1209 = vunpack.c.l.b16 %v257
    %v1210 = vunpack.c.h.b16 %v257
    %v1211 = vunpack.c.l.b16 %v258
    %v1212 = vunpack.c.h.b16 %v258
    %v1213 = vunpack.c.l.b16 %v259
    %v1214 = vunpack.c.h.b16 %v259
    %v1215 = vunpack.c.l.b16 %v260
    %v1216 = vunpack.c.h.b16 %v260
    %v1217 = vunpack.c.l.b16 %v261
    %v1218 = vunpack.c.h.b16 %v261
    %v1219 = vunpack.c.l.b16 %v262
    %v1220 = vunpack.c.h.b16 %v262
    %v1221 = vunpack.c.l.b16 %v263
    %v1222 = vunpack.c.h.b16 %v263
    %v1223 = vunpack.c.l.b16 %v264
    %v1224 = vunpack.c.h.b16 %v264
    %v1225 = vunpack.c.l.b16 %v265
    %v1226 = vunpack.c.h.b16 %v265
    %v1227 = vunpack.c.l.b16 %v266
    %v1228 = vunpack.c.h.b16 %v266
    %v1229 = vunpack.c.l.b16 %v267
    %v1230 = vunpack.c.h.b16 %v267
    %v1231 = vunpack.c.l.b16 %v268
    %v1232 = vunpack.c.h.b16 %v268
    %v1233 = vunpack.c.l.b16 %v269
    %v1234 = vunpack.c.h.b16 %v269
    %v1235 = vunpack.c.l.b16 %v270
    %v1236 = vunpack.c.h.b16 %v270
    %v1237 = vunpack.c.l.b16 %v271
    %v1238 = vunpack.c.h.b16 %v271
    %v1239 = vunpack.c.l.b16 %v272
    %v1240 = vunpack.c.h.b16 %v272
    %v1241 = vunpack.c.l.b16 %v273
    %v1242 = vunpack.c.h.b16 %v273
    %v1243 = vunpack.c.l.b16 %v274
    %v1244 = vunpack.c.h.b16 %v274
    %v1245 = vunpack.c.l.b16 %v275
    %v1246 = vunpack.c.h.b16 %v275
    %v1247 = vunpack.c.l.b16 %v276
    %v1248 = vunpack.c.h.b16 %v276
    %v1249 = vunpack.c.l.b16 %v277
    %v1250 = vunpack.c.h.b16 %v277
    %v1251 = vunpack.c.l.b16 %v278
    %v1252 = vunpack.c.h.b16 %v278
    %v1253 = vunpack.c.l.b16 %v279
    %v1254 = vunpack.c.h.b16 %v279
    %v1255 = vunpack.c.l.b16 %v280
    %v1256 = vunpack.c.h.b16 %v280
    %v1257 = vunpack.c.l.b16 %v281
    %v1258 = vunpack.c.h.b16 %v281
    %v1259 = vunpack.c.l.b16 %v282
    %v1260 = vunpack.c.h.b16 %v282
    %v1261 = vunpack.c.l.b16 %v283
    %v1262 = vunpack.c.h.b16 %v283
    %v1263 = vunpack.c.l.b16 %v284
    %v1264 = vunpack.c.h.b16 %v284
    %v1265 = vunpack.c.l.b16 %v285
    %v1266 = vunpack.c.h.b16 %v285
    %v1267 = vunpack.c.l.b16 %v286
    %v1268 = vunpack.c.h.b16 %v286
    %v1269 = vunpack.c.l.b16 %v287
    %v1270 = vunpack.c.h.b16 %v287
    %v1271 = vunpack.c.l.b16 %v288
    %v1272 = vunpack.c.h.b16 %v288
    %v1273 = vunpack.c.l.b16 %v289
    %v1274 = vunpack.c.h.b16 %v289
    %v1275 = vunpack.c.l.b16 %v290
    %v1276 = vunpack.c.h.b16 %v290
    %v1277 = vunpack.c.l.b16 %v291
    %v1278 = vunpack.c.h.b16 %v291
    %v1279 = vunpack.c.l.b16 %v292
    %v1280 = vunpack.c.h.b16 %v292
    %v1281 = vunpack.c.l.b16 %v293
    %v1282 = vunpack.c.h.b16 %v293
    %v1283 = vunpack.c.l.b16 %v294
    %v1284 = vunpack.c.h.b16 %v294
    %v1285 = vunpack.c.l.b16 %v295
    %v1286 = vunpack.c.h.b16 %v295
    %v1287 = vunpack.c.l.b16 %v296
    %v1288 = vunpack.c.h.b16 %v296
    %v1289 = vunpack.c.l.b16 %v297
    %v1290 = vunpack.c.h.b16 %v297
    %v1291 = vunpack.c.l.b16 %v298
    %v1292 = vunpack.c.h.b16 %v298
    %v1293 = vunpack.c.l.b16 %v299
    %v1294 = vunpack.c.h.b16 %v299
    %v1295 = vunpack.c.l.b16 %v300
    %v1296 = vunpack.c.h.b16 %v300
    %v1297 = vunpack.c.l.b16 %v301
    %v1298 = vunpack.c.h.b16 %v301
    %v1299 = vunpack.c.l.b16 %v302
    %v1300 = vunpack.c.h.b16 %v302
    %v1301 = vunpack.c.l.b16 %v303
    %v1302 = vunpack.c.h.b16 %v303
    %v1303 = vunpack.c.l.b16 %v304
    %v1304 = vunpack.c.h.b16 %v304
    %v1305 = vunpack.c.l.b16 %v305
    %v1306 = vunpack.c.h.b16 %v305
    %v1307 = vunpack.c.l.b16 %v306
    %v1308 = vunpack.c.h.b16 %v306
    %v1309 = vunpack.c.l.b16 %v307
    %v1310 = vunpack.c.h.b16 %v307
    %v1311 = vunpack.c.l.b16 %v308
    %v1312 = vunpack.c.h.b16 %v308
    %v1313 = vunpack.c.l.b16 %v309
    %v1314 = vunpack.c.h.b16 %v309
    %v1315 = vunpack.c.l.b16 %v310
    %v1316 = vunpack.c.h.b16 %v310
    %v1317 = vunpack.c.l.b16 %v311
    %v1318 = vunpack.c.h.b16 %v311
    %v1319 = vunpack.c.l.b16 %v312
    %v1320 = vunpack.c.h.b16 %v312
    %v1321 = vunpack.c.l.b16 %v313
    %v1322 = vunpack.c.h.b16 %v313
    %v1323 = vunpack.c.l.b16 %v314
    %v1324 = vunpack.c.h.b16 %v314
    %v1325 = vunpack.c.l.b16 %v315
    %v1326 = vunpack.c.h.b16 %v315
    %v1327 = vunpack.c.l.b16 %v316
    %v1328 = vunpack.c.h.b16 %v316
    %v1329 = vunpack.c.l.b16 %v317
    %v1330 = vunpack.c.h.b16 %v317
    %v1331 = vunpack.c.l.b16 %v318
    %v1332 = vunpack.c.h.b16 %v318
    %v1333 = vunpack.c.l.b16 %v319
    %v1334 = vunpack.c.h.b16 %v319
    %v1335 = vunpack.c.l.b16 %v320
    %v1336 = vunpack.c.h.b16 %v320
    %v1337 = vunpack.c.l.b16 %v321
    %v1338 = vunpack.c.h.b16 %v321
    %v1339 = vunpack.c.l.b16 %v322
    %v1340 = vunpack.c.h.b16 %v322
    %v1341 = vunpack.c.l.b16 %v323
    %v1342 = vunpack.c.h.b16 %v323
    %v1343 = vunpack.c.l.b16 %v324
    %v1344 = vunpack.c.h.b16 %v324
    %v1345 = vunpack.c.l.b16 %v325
    %v1346 = vunpack.c.h.b16 %v325
    %v1347 = vunpack.c.l.b16 %v326
    %v1348 = vunpack.c.h.b16 %v326
    %v1349 = vunpack.c.l.b16 %v327
    %v1350 = vunpack.c.h.b16 %v327
    %v1351 = vunpack.c.l.b16 %v328
    %v1352 = vunpack.c.h.b16 %v328
    %v1353 = vunpack.c.l.b16 %v329
    %v1354 = vunpack.c.h.b16 %v329
    %v1355 = vunpack.c.l.b16 %v330
    %v1356 = vunpack.c.h.b16 %v330
    %v1357 = vunpack.c.l.b16 %v331
    %v1358 = vunpack.c.h.b16 %v331
    %v1359 = vunpack.c.l.b16 %v332
    %v1360 = vunpack.c.h.b16 %v332
    %v1361 = vunpack.c.l.b16 %v333
    %v1362 = vunpack.c.h.b16 %v333
    %v1363 = vunpack.c.l.b16 %v334
    %v1364 = vunpack.c.h.b16 %v334
    %v1365 = vunpack.c.l.b16 %v335
    %v1366 = vunpack.c.h.b16 %v335
    %v1367 = vunpack.c.l.b16 %v336
    %v1368 = vunpack.c.h.b16 %v336
    %v1369 = vunpack.c.l.b16 %v337
    %v1370 = vunpack.c.h.b16 %v337
    %v1371 = vunpack.c.l.b16 %v338
    %v1372 = vunpack.c.h.b16 %v338
    %v1373 = vunpack.c.l.b16 %v339
    %v1374 = vunpack.c.h.b16 %v339
    %v1375 = vunpack.c.l.b16 %v340
    %v1376 = vunpack.c.h.b16 %v340
    %v1377 = vunpack.c.l.b16 %v341
    %v1378 = vunpack.c.h.b16 %v341
    %v1379 = vunpack.c.l.b16 %v342
    %v1380 = vunpack.c.h.b16 %v342
    %v1381 = vunpack.c.l.b16 %v343
    %v1382 = vunpack.c.h.b16 %v343
    %v1383 = vunpack.c.l.b16 %v344
    %v1384 = vunpack.c.h.b16 %v344
    %v1385 = vunpack.c.l.b16 %v345
    %v1386 = vunpack.c.h.b16 %v345
    %v1387 = vunpack.c.l.b16 %v346
    %v1388 = vunpack.c.h.b16 %v346
    %v1389 = vunpack.c.l.b16 %v347
    %v1390 = vunpack.c.h.b16 %v347
    %v1391 = vunpack.c.l.b16 %v348
    %v1392 = vunpack.c.h.b16 %v348
    %v1393 = vunpack.c.l.b16 %v349
    %v1394 = vunpack.c.h.b16 %v349
    %v1395 = vunpack.c.l.b16 %v350
    %v1396 = vunpack.c.h.b16 %v350
    %v1397 = vunpack.c.l.b16 %v351
    %v1398 = vunpack.c.h.b16 %v351
    %v1399 = vunpack.c.l.b16 %v352
    %v1400 = vunpack.c.h.b16 %v352
    %v1401 = vunpack.c.l.b16 %v353
    %v1402 = vunpack.c.h.b16 %v353
    %v1403 = vunpack.c.l.b16 %v354
    %v1404 = vunpack.c.h.b16 %v354
    %v1405 = vunpack.c.l.b16 %v355
    %v1406 = vunpack.c.h.b16 %v355
    %v1407 = vunpack.c.l.b16 %v356
    %v1408 = vunpack.c.h.b16 %v356
    %v1409 = vunpack.c.l.b16 %v357
    %v1410 = vunpack.c.h.b16 %v357
    %v1411 = vunpack.c.l.b16 %v358
    %v1412 = vunpack.c.h.b16 %v358
    %v1413 = vunpack.c.l.b16 %v359
    %v1414 = vunpack.c.h.b16 %v359
    %v1415 = vunpack.c.l.b16 %v360
    %v1416 = vunpack.c.h.b16 %v360
    %v1417 = vunpack.c.l.b16 %v361
    %v1418 = vunpack.c.h.b16 %v361
    %v1419 = vunpack.c.l.b16 %v362
    %v1420 = vunpack.c.h.b16 %v362
    %v1421 = vunpack.c.l.b16 %v363
    %v1422 = vunpack.c.h.b16 %v363
    %v1423 = vunpack.c.l.b16 %v364
    %v1424 = vunpack.c.h.b16 %v364
    %v1425 = vunpack.c.l.b16 %v365
    %v1426 = vunpack.c.h.b16 %v365
    %v1427 = vunpack.c.l.b16 %v366
    %v1428 = vunpack.c.h.b16 %v366
    %v1429 = vunpack.c.l.b16 %v367
    %v1430 = vunpack.c.h.b16 %v367
    %v1431 = vunpack.c.l.b16 %v368
    %v1432 = vunpack.c.h.b16 %v368
    %v1433 = vunpack.c.l.b16 %v369
    %v1434 = vunpack.c.h.b16 %v369
    %v1435 = vunpack.c.l.b16 %v370
    %v1436 = vunpack.c.h.b16 %v370
    %v1437 = vunpack.c.l.b16 %v371
    %v1438 = vunpack.c.h.b16 %v371
    %v1439 = vunpack.c.l.b16 %v372
    %v1440 = vunpack.c.h.b16 %v372
    %v1441 = vunpack.c.l.b16 %v373
    %v1442 = vunpack.c.h.b16 %v373
    %v1443 = vunpack.c.l.b16 %v374
    %v1444 = vunpack.c.h.b16 %v374
    %v1445 = vunpack.c.l.b16 %v375
    %v1446 = vunpack.c.h.b16 %v375
    %v1447 = vunpack.c.l.b16 %v376
    %v1448 = vunpack.c.h.b16 %v376
    %v1449 = vunpack.c.l.b16 %v377
    %v1450 = vunpack.c.h.b16 %v377
    %v1451 = vunpack.c.l.b16 %v378
    %v1452 = vunpack.c.h.b16 %v378
    %v1453 = vunpack.c.l.b16 %v379
    %v1454 = vunpack.c.h.b16 %v379
    %v1455 = vunpack.c.l.b16 %v380
    %v1456 = vunpack.c.h.b16 %v380
    %v1457 = vunpack.c.l.b16 %v381
    %v1458 = vunpack.c.h.b16 %v381
    %v1459 = vunpack.c.l.b16 %v382
    %v1460 = vunpack.c.h.b16 %v382
    %v1461 = vunpack.c.l.b16 %v383
    %v1462 = vunpack.c.h.b16 %v383
    %v1463 = vunpack.c.l.b16 %v384
    %v1464 = vunpack.c.h.b16 %v384
    %v1465 = vunpack.c.l.b16 %v385
    %v1466 = vunpack.c.h.b16 %v385
    %v1467 = vunpack.c.l.b16 %v386
    %v1468 = vunpack.c.h.b16 %v386
    %v1469 = vunpack.c.l.b16 %v387
    %v1470 = vunpack.c.h.b16 %v387
    %v1471 = vunpack.c.l.b16 %v388
    %v1472 = vunpack.c.h.b16 %v388
    %v1473 = vunpack.c.l.b16 %v389
    %v1474 = vunpack.c.h.b16 %v389
    %v1475 = vunpack.c.l.b16 %v390
    %v1476 = vunpack.c.h.b16 %v390
    %v1477 = vunpack.c.l.b16 %v391
    %v1478 = vunpack.c.h.b16 %v391
    %v1479 = vunpack.c.l.b16 %v392
    %v1480 = vunpack.c.h.b16 %v392
    %v1481 = vunpack.c.l.b16 %v393
    %v1482 = vunpack.c.h.b16 %v393
    %v1483 = vunpack.c.l.b16 %v394
    %v1484 = vunpack.c.h.b16 %v394
    %v1485 = vunpack.c.l.b16 %v395
    %v1486 = vunpack.c.h.b16 %v395
    %v1487 = vunpack.c.l.b16 %v396
    %v1488 = vunpack.c.h.b16 %v396
    %v1489 = vunpack.c.l.b16 %v397
    %v1490 = vunpack.c.h.b16 %v397
    %v1491 = vunpack.c.l.b16 %v398
    %v1492 = vunpack.c.h.b16 %v398
    %v1493 = vunpack.c.l.b16 %v399
    %v1494 = vunpack.c.h.b16 %v399
    %v1495 = vunpack.c.l.b16 %v400
    %v1496 = vunpack.c.h.b16 %v400
    %v1497 = vunpack.c.l.b16 %v401
    %v1498 = vunpack.c.h.b16 %v401
    %v1499 = vunpack.c.l.b16 %v402
    %v1500 = vunpack.c.h.b16 %v402
    %v1501 = vunpack.c.l.b16 %v403
    %v1502 = vunpack.c.h.b16 %v403
    %v1503 = vunpack.c.l.b16 %v404
    %v1504 = vunpack.c.h.b16 %v404
    %v1505 = vunpack.c.l.b16 %v405
    %v1506 = vunpack.c.h.b16 %v405
    %v1507 = vunpack.c.l.b16 %v406
    %v1508 = vunpack.c.h.b16 %v406
    %v1509 = vunpack.c.l.b16 %v407
    %v1510 = vunpack.c.h.b16 %v407
    %v1511 = vunpack.c.l.b16 %v408
    %v1512 = vunpack.c.h.b16 %v408
    %v1513 = vunpack.c.l.b16 %v409
    %v1514 = vunpack.c.h.b16 %v409
    %v1515 = vunpack.c.l.b16 %v410
    %v1516 = vunpack.c.h.b16 %v410
    %v1517 = vunpack.c.l.b16 %v411
    %v1518 = vunpack.c.h.b16 %v411
    %v1519 = vunpack.c.l.b16 %v412
    %v1520 = vunpack.c.h.b16 %v412
    %v1521 = vunpack.c.l.b16 %v413
    %v1522 = vunpack.c.h.b16 %v413
    %v1523 = vunpack.c.l.b16 %v414
    %v1524 = vunpack.c.h.b16 %v414
    %v1525 = vunpack.c.l.b16 %v415
    %v1526 = vunpack.c.h.b16 %v415
    %v1527 = vunpack.c.l.b16 %v416
    %v1528 = vunpack.c.h.b16 %v416
    %v1529 = vunpack.c.l.b16 %v417
    %v1530 = vunpack.c.h.b16 %v417
    %v1531 = vunpack.c.l.b16 %v418
    %v1532 = vunpack.c.h.b16 %v418
    %v1533 = vunpack.c.l.b16 %v419
    %v1534 = vunpack.c.h.b16 %v419
    %v1535 = vunpack.c.l.b16 %v420
    %v1536 = vunpack.c.h.b16 %v420
    %v1537 = vunpack.c.l.b16 %v421
    %v1538 = vunpack.c.h.b16 %v421
    %v1539 = vunpack.c.l.b16 %v422
    %v1540 = vunpack.c.h.b16 %v422
    %v1541 = vunpack.c.l.b16 %v423
    %v1542 = vunpack.c.h.b16 %v423
    %v1543 = vunpack.c.l.b16 %v424
    %v1544 = vunpack.c.h.b16 %v424
    %v1545 = vunpack.c.l.b16 %v425
    %v1546 = vunpack.c.h.b16 %v425
    %v1547 = vunpack.c.l.b16 %v426
    %v1548 = vunpack.c.h.b16 %v426
    %v1549 = vunpack.c.l.b16 %v427
    %v1550 = vunpack.c.h.b16 %v427
    %v1551 = vunpack.c.l.b16 %v428
    %v1552 = vunpack.c.h.b16 %v428
    %v1553 = vunpack.c.l.b16 %v429
    %v1554 = vunpack.c.h.b16 %v429
    %v1555 = vunpack.c.l.b16 %v430
    %v1556 = vunpack.c.h.b16 %v430
    %v1557 = vunpack.c.l.b16 %v431
    %v1558 = vunpack.c.h.b16 %v431
    %v1559 = vunpack.c.l.b16 %v432
    %v1560 = vunpack.c.h.b16 %v432
    %v1561 = vunpack.c.l.b16 %v433
    %v1562 = vunpack.c.h.b16 %v433
    %v1563 = vunpack.c.l.b16 %v434
    %v1564 = vunpack.c.h.b16 %v434
    %v1565 = vunpack.c.l.b16 %v435
    %v1566 = vunpack.c.h.b16 %v435
    %v1567 = vunpack.c.l.b16 %v436
    %v1568 = vunpack.c.h.b16 %v436
    %v1569 = vunpack.c.l.b16 %v437
    %v1570 = vunpack.c.h.b16 %v437
    %v1571 = vunpack.c.l.b16 %v438
    %v1572 = vunpack.c.h.b16 %v438
    %v1573 = vunpack.c.l.b16 %v439
    %v1574 = vunpack.c.h.b16 %v439
    %v1575 = vunpack.c.l.b16 %v440
    %v1576 = vunpack.c.h.b16 %v440
    %v1577 = vunpack.c.l.b16 %v441
    %v1578 = vunpack.c.h.b16 %v441
    %v1579 = vunpack.c.l.b16 %v442
    %v1580 = vunpack.c.h.b16 %v442
    %v1581 = vunpack.c.l.b16 %v443
    %v1582 = vunpack.c.h.b16 %v443
    %v1583 = vunpack.c.l.b16 %v444
    %v1584 = vunpack.c.h.b16 %v444
    %v1585 = vunpack.c.l.b16 %v445
    %v1586 = vunpack.c.h.b16 %v445
    %v1587 = vunpack.c.l.b16 %v446
    %v1588 = vunpack.c.h.b16 %v446
    %v1589 = vunpack.c.l.b16 %v447
    %v1590 = vunpack.c.h.b16 %v447
    %v1591 = vunpack.c.l.b16 %v448
    %v1592 = vunpack.c.h.b16 %v448
    %v1593 = vunpack.c.l.b16 %v449
    %v1594 = vunpack.c.h.b16 %v449
    %v1595 = vunpack.c.l.b16 %v450
    %v1596 = vunpack.c.h.b16 %v450
    %v1597 = vunpack.c.l.b16 %v451
    %v1598 = vunpack.c.h.b16 %v451
    %v1599 = vunpack.c.l.b16 %v452
    %v1600 = vunpack.c.h.b16 %v452
    %v1601 = vunpack.c.l.b16 %v453
    %v1602 = vunpack.c.h.b16 %v453
    %v1603 = vunpack.c.l.b16 %v454
    %v1604 = vunpack.c.h.b16 %v454
    %v1605 = vunpack.c.l.b16 %v455
    %v1606 = vunpack.c.h.b16 %v455
    %v1607 = vunpack.c.l.b16 %v456
    %v1608 = vunpack.c.h.b16 %v456
    %v1609 = vunpack.c.l.b16 %v457
    %v1610 = vunpack.c.h.b16 %v457
    %v1611 = vunpack.c.l.b16 %v458
    %v1612 = vunpack.c.h.b16 %v458
    %v1613 = vunpack.c.l.b16 %v459
    %v1614 = vunpack.c.h.b16 %v459
    %v1615 = vunpack.c.l.b16 %v460
    %v1616 = vunpack.c.h.b16 %v460
    %v1617 = vunpack.c.l.b16 %v461
    %v1618 = vunpack.c.h.b16 %v461
    %v1619 = vunpack.c.l.b16 %v462
    %v1620 = vunpack.c.h.b16 %v462
    %v1621 = vunpack.c.l.b16 %v463
    %v1622 = vunpack.c.h.b16 %v463
    %v1623 = vunpack.c.l.b16 %v464
    %v1624 = vunpack.c.h.b16 %v464
    %v1625 = vunpack.c.l.b16 %v465
    %v1626 = vunpack.c.h.b16 %v465
    %v1627 = vunpack.c.l.b16 %v466
    %v1628 = vunpack.c.h.b16 %v466
    %v1629 = vunpack.c.l.b16 %v467
    %v1630 = vunpack.c.h.b16 %v467
    %v1631 = vunpack.c.l.b16 %v468
    %v1632 = vunpack.c.h.b16 %v468
    %v1633 = vunpack.c.l.b16 %v469
    %v1634 = vunpack.c.h.b16 %v469
    %v1635 = vunpack.c.l.b16 %v470
    %v1636 = vunpack.c.h.b16 %v470
    %v1637 = vunpack.c.l.b16 %v471
    %v1638 = vunpack.c.h.b16 %v471
    %v1639 = vunpack.c.l.b16 %v472
    %v1640 = vunpack.c.h.b16 %v472
    %v1641 = vunpack.c.l.b16 %v473
    %v1642 = vunpack.c.h.b16 %v473
    %v1643 = vunpack.c.l.b16 %v474
    %v1644 = vunpack.c.h.b16 %v474
    %v1645 = vunpack.c.l.b16 %v475
    %v1646 = vunpack.c.h.b16 %v475
    %v1647 = vunpack.c.l.b16 %v476
    %v1648 = vunpack.c.h.b16 %v476
    %v1649 = vunpack.c.l.b16 %v477
    %v1650 = vunpack.c.h.b16 %v477
    %v1651 = vunpack.c.l.b16 %v478
    %v1652 = vunpack.c.h.b16 %v478
    %v1653 = vunpack.c.l.b16 %v479
    %v1654 = vunpack.c.h.b16 %v479
    %v1655 = vunpack.c.l.b16 %v480
    %v1656 = vunpack.c.h.b16 %v480
    %v1657 = vunpack.c.l.b16 %v481
    %v1658 = vunpack.c.h.b16 %v481
    %v1659 = vunpack.c.l.b16 %v482
    %v1660 = vunpack.c.h.b16 %v482
    %v1661 = vunpack.c.l.b16 %v483
    %v1662 = vunpack.c.h.b16 %v483
    %v1663 = vunpack.c.l.b16 %v484
    %v1664 = vunpack.c.h.b16 %v484
    %v1665 = vunpack.c.l.b16 %v485
    %v1666 = vunpack.c.h.b16 %v485
    %v1667 = vunpack.c.l.b16 %v486
    %v1668 = vunpack.c.h.b16 %v486
    %v1669 = vunpack.c.l.b16 %v487
    %v1670 = vunpack.c.h.b16 %v487
    %v1671 = vunpack.c.l.b16 %v488
    %v1672 = vunpack.c.h.b16 %v488
    %v1673 = vunpack.c.l.b16 %v489
    %v1674 = vunpack.c.h.b16 %v489
    %v1675 = vunpack.c.l.b16 %v490
    %v1676 = vunpack.c.h.b16 %v490
    %v1677 = vunpack.c.l.b16 %v491
    %v1678 = vunpack.c.h.b16 %v491
    %v1679 = vunpack.c.l.b16 %v492
    %v1680 = vunpack.c.h.b16 %v492
    %v1681 = vunpack.c.l.b16 %v493
    %v1682 = vunpack.c.h.b16 %v493
    %v1683 = vunpack.c.l.b16 %v494
    %v1684 = vunpack.c.h.b16 %v494
    %v1685 = vunpack.c.l.b16 %v495
    %v1686 = vunpack.c.h.b16 %v495
    %v1687 = vunpack.c.l.b16 %v496
    %v1688 = vunpack.c.h.b16 %v496
    %v1689 = vunpack.c.l.b16 %v497
    %v1690 = vunpack.c.h.b16 %v497
    %v1691 = vunpack.c.l.b16 %v498
    %v1692 = vunpack.c.h.b16 %v498
    %v1693 = vpack.c.b16 %v933, %v925
    %v1694 = vpack.c.b16 %v934, %v926
    %v1695 = vpack.c.b16 %v935, %v927
    %v1696 = vpack.c.b16 %v936, %v928
    %v1697 = vpack.c.b16 %v937, %v929
    %v1698 = vpack.c.b16 %v938, %v930
    %v1699 = vpack.c.b16 %v939, %v931
    %v1700 = vpack.c.b16 %v940, %v932
    %v1701 = vpack.c.b16 %v949, %v941
    %v1702 = vpack.c.b16 %v950, %v942
    %v1703 = vpack.c.b16 %v951, %v943
    %v1704 = vpack.c.b16 %v952, %v944
    %v1705 = vpack.c.b16 %v953, %v945
    %v1706 = vpack.c.b16 %v954, %v946
    %v1707 = vpack.c.b16 %v955, %v947
    %v1708 = vpack.c.b16 %v956, %v948
    %v1709 = vpack.c.b16 %v965, %v957
    %v1710 = vpack.c.b16 %v966, %v958
    %v1711 = vpack.c.b16 %v967, %v959
    %v1712 = vpack.c.b16 %v968, %v960
    %v1713 = vpack.c.b16 %v969, %v961
    %v1714 = vpack.c.b16 %v970, %v962
    %v1715 = vpack.c.b16 %v971, %v963
    %v1716 = vpack.c.b16 %v972, %v964
    %v1717 = vpack.c.b16 %v981, %v973
    %v1718 = vpack.c.b16 %v982, %v974
    %v1719 = vpack.c.b16 %v983, %v975
    %v1720 = vpack.c.b16 %v984, %v976
    %v1721 = vpack.c.b16 %v985, %v977
    %v1722 = vpack.c.b16 %v986, %v978
    %v1723 = vpack.c.b16 %v987, %v979
    %v1724 = vpack.c.b16 %v988, %v980
    %v1725 = vpack.c.b16 %v997, %v989
    %v1726 = vpack.c.b16 %v998, %v990
    %v1727 = vpack.c.b16 %v999, %v991
    %v1728 = vpack.c.b16 %v1000, %v992
    %v1729 = vpack.c.b16 %v1001, %v993
    %v1730 = vpack.c.b16 %v1002, %v994
    %v1731 = vpack.c.b16 %v1003, %v995
    %v1732 = vpack.c.b16 %v1004, %v996
    %v1733 = vpack.c.b16 %v1013, %v1005
    %v1734 = vpack.c.b16 %v1014, %v1006
    %v1735 = vpack.c.b16 %v1015, %v1007
    %v1736 = vpack.c.b16 %v1016, %v1008
    %v1737 = vpack.c.b16 %v1017, %v1009
    %v1738 = vpack.c.b16 %v1018, %v1010
    %v1739 = vpack.c.b16 %v1019, %v1011
    %v1740 = vpack.c.b16 %v1020, %v1012
    %v1741 = vpack.c.b16 %v1029, %v1021
    %v1742 = vpack.c.b16 %v1030, %v1022
    %v1743 = vpack.c.b16 %v1031, %v1023
    %v1744 = vpack.c.b16 %v1032, %v1024
    %v1745 = vpack.c.b16 %v1033, %v1025
    %v1746 = vpack.c.b16 %v1034, %v1026
    %v1747 = vpack.c.b16 %v1035, %v1027
    %v1748 = vpack.c.b16 %v1036, %v1028
    %v1749 = vpack.c.b16 %v1045, %v1037
    %v1750 = vpack.c.b16 %v1046, %v1038
    %v1751 = vpack.c.b16 %v1047, %v1039
    %v1752 = vpack.c.b16 %v1048, %v1040
    %v1753 = vpack.c.b16 %v1049, %v1041
    %v1754 = vpack.c.b16 %v1050, %v1042
    %v1755 = vpack.c.b16 %v1051, %v1043
    %v1756 = vpack.c.b16 %v1052, %v1044
    %v1757 = vpack.c.b16 %v1061, %v1053
    %v1758 = vpack.c.b16 %v1062, %v1054
    %v1759 = vpack.c.b16 %v1063, %v1055
    %v1760 = vpack.c.b16 %v1064, %v1056
    %v1761 = vpack.c.b16 %v1065, %v1057
    %v1762 = vpack.c.b16 %v1066, %v1058
    %v1763 = vpack.c.b16 %v1067, %v1059
    %v1764 = vpack.c.b16 %v1068, %v1060
    %v1765 = vpack.c.b16 %v1077, %v1069
    %v1766 = vpack.c.b16 %v1078, %v1070
    %v1767 = vpack.c.b16 %v1079, %v1071
    %v1768 = vpack.c.b16 %v1080, %v1072
    %v1769 = vpack.c.b16 %v1081, %v1073
    %v1770 = vpack.c.b16 %v1082, %v1074
    %v1771 = vpack.c.b16 %v1083, %v1075
    %v1772 = vpack.c.b16 %v1084, %v1076
    %v1773 = vpack.c.b16 %v1093, %v1085
    %v1774 = vpack.c.b16 %v1094, %v1086
    %v1775 = vpack.c.b16 %v1095, %v1087
    %v1776 = vpack.c.b16 %v1096, %v1088
    %v1777 = vpack.c.b16 %v1097, %v1089
    %v1778 = vpack.c.b16 %v1098, %v1090
    %v1779 = vpack.c.b16 %v1099, %v1091
    %v1780 = vpack.c.b16 %v1100, %v1092
    %v1781 = vpack.c.b16 %v1109, %v1101
    %v1782 = vpack.c.b16 %v1110, %v1102
    %v1783 = vpack.c.b16 %v1111, %v1103
    %v1784 = vpack.c.b16 %v1112, %v1104
    %v1785 = vpack.c.b16 %v1113, %v1105
    %v1786 = vpack.c.b16 %v1114, %v1106
    %v1787 = vpack.c.b16 %v1115, %v1107
    %v1788 = vpack.c.b16 %v1116, %v1108
    %v1789 = vpack.c.b16 %v1125, %v1117
    %v1790 = vpack.c.b16 %v1126, %v1118
    %v1791 = vpack.c.b16 %v1127, %v1119
    %v1792 = vpack.c.b16 %v1128, %v1120
    %v1793 = vpack.c.b16 %v1129, %v1121
    %v1794 = vpack.c.b16 %v1130, %v1122
    %v1795 = vpack.c.b16 %v1131, %v1123
    %v1796 = vpack.c.b16 %v1132, %v1124
    %v1797 = vpack.c.b16 %v1141, %v1133
    %v1798 = vpack.c.b16 %v1142, %v1134
    %v1799 = vpack.c.b16 %v1143, %v1135
    %v1800 = vpack.c.b16 %v1144, %v1136
    %v1801 = vpack.c.b16 %v1145, %v1137
    %v1802 = vpack.c.b16 %v1146, %v1138
    %v1803 = vpack.c.b16 %v1147, %v1139
    %v1804 = vpack.c.b16 %v1148, %v1140
    %v1805 = vpack.c.b16 %v1157, %v1149
    %v1806 = vpack.c.b16 %v1158, %v1150
    %v1807 = vpack.c.b16 %v1159, %v1151
    %v1808 = vpack.c.b16 %v1160, %v1152
    %v1809 = vpack.c.b16 %v1161, %v1153
    %v1810 = vpack.c.b16 %v1162, %v1154
    %v1811 = vpack.c.b16 %v1163, %v1155
    %v1812 = vpack.c.b16 %v1164, %v1156
    %v1813 = vpack.c.b16 %v1173, %v1165
    %v1814 = vpack.c.b16 %v1174, %v1166
    %v1815 = vpack.c.b16 %v1175, %v1167
    %v1816 = vpack.c.b16 %v1176, %v1168
    %v1817 = vpack.c.b16 %v1177, %v1169
    %v1818 = vpack.c.b16 %v1178, %v1170
    %v1819 = vpack.c.b16 %v1179, %v1171
    %v1820 = vpack.c.b16 %v1180, %v1172
    %v1821 = vpack.c.b16 %v1189, %v1181
    %v1822 = vpack.c.b16 %v1190, %v1182
    %v1823 = vpack.c.b16 %v1191, %v1183
    %v1824 = vpack.c.b16 %v1192, %v1184
    %v1825 = vpack.c.b16 %v1193, %v1185
    %v1826 = vpack.c.b16 %v1194, %v1186
    %v1827 = vpack.c.b16 %v1195, %v1187
    %v1828 = vpack.c.b16 %v1196, %v1188
    %v1829 = vpack.c.b16 %v1205, %v1197
    %v1830 = vpack.c.b16 %v1206, %v1198
    %v1831 = vpack.c.b16 %v1207, %v1199
    %v1832 = vpack.c.b16 %v1208, %v1200
    %v1833 = vpack.c.b16 %v1209, %v1201
    %v1834 = vpack.c.b16 %v1210, %v1202
    %v1835 = vpack.c.b16 %v1211, %v1203
    %v1836 = vpack.c.b16 %v1212, %v1204
    %v1837 = vpack.c.b16 %v1221, %v1213
    %v1838 = vpack.c.b16 %v1222, %v1214
    %v1839 = vpack.c.b16 %v1223, %v1215
    %v1840 = vpack.c.b16 %v1224, %v1216
    %v1841 = vpack.c.b16 %v1225, %v1217
    %v1842 = vpack.c.b16 %v1226, %v1218
    %v1843 = vpack.c.b16 %v1227, %v1219
    %v1844 = vpack.c.b16 %v1228, %v1220
    %v1845 = vpack.c.b16 %v1237, %v1229
    %v1846 = vpack.c.b16 %v1238, %v1230
    %v1847 = vpack.c.b16 %v1239, %v1231
    %v1848 = vpack.c.b16 %v1240, %v1232
    %v1849 = vpack.c.b16 %v1241, %v1233
    %v1850 = vpack.c.b16 %v1242, %v1234
    %v1851 = vpack.c.b16 %v1243, %v1235
    %v1852 = vpack.c.b16 %v1244, %v1236
    %v1853 = vpack.c.b16 %v1253, %v1245
    %v1854 = vpack.c.b16 %v1254, %v1246
    %v1855 = vpack.c.b16 %v1255, %v1247
    %v1856 = vpack.c.b16 %v1256, %v1248
    %v1857 = vpack.c.b16 %v1257, %v1249
    %v1858 = vpack.c.b16 %v1258, %v1250
    %v1859 = vpack.c.b16 %v1259, %v1251
    %v1860 = vpack.c.b16 %v1260, %v1252
    %v1861 = vpack.c.b16 %v1269, %v1261
    %v1862 = vpack.c.b16 %v1270, %v1262
    %v1863 = vpack.c.b16 %v1271, %v1263
    %v1864 = vpack.c.b16 %v1272, %v1264
    %v1865 = vpack.c.b16 %v1273, %v1265
    %v1866 = vpack.c.b16 %v1274, %v1266
    %v1867 = vpack.c.b16 %v1275, %v1267
    %v1868 = vpack.c.b16 %v1276, %v1268
    %v1869 = vpack.c.b16 %v1285, %v1277
    %v1870 = vpack.c.b16 %v1286, %v1278
    %v1871 = vpack.c.b16 %v1287, %v1279
    %v1872 = vpack.c.b16 %v1288, %v1280
    %v1873 = vpack.c.b16 %v1289, %v1281
    %v1874 = vpack.c.b16 %v1290, %v1282
    %v1875 = vpack.c.b16 %v1291, %v1283
    %v1876 = vpack.c.b16 %v1292, %v1284
    %v1877 = vpack.c.b16 %v1301, %v1293
    %v1878 = vpack.c.b16 %v1302, %v1294
    %v1879 = vpack.c.b16 %v1303, %v1295
    %v1880 = vpack.c.b16 %v1304, %v1296
    %v1881 = vpack.c.b16 %v1305, %v1297
    %v1882 = vpack.c.b16 %v1306, %v1298
    %v1883 = vpack.c.b16 %v1307, %v1299
    %v1884 = vpack.c.b16 %v1308, %v1300
    %v1885 = vpack.c.b16 %v1317, %v1309
    %v1886 = vpack.c.b16 %v1318, %v1310
    %v1887 = vpack.c.b16 %v1319, %v1311
    %v1888 = vpack.c.b16 %v1320, %v1312
    %v1889 = vpack.c.b16 %v1321, %v1313
    %v1890 = vpack.c.b16 %v1322, %v1314
    %v1891 = vpack.c.b16 %v1323, %v1315
    %v1892 = vpack.c.b16 %v1324, %v1316
    %v1893 = vpack.c.b16 %v1333, %v1325
    %v1894 = vpack.c.b16 %v1334, %v1326
    %v1895 = vpack.c.b16 %v1335, %v1327
    %v1896 = vpack.c.b16 %v1336, %v1328
    %v1897 = vpack.c.b16 %v1337, %v1329
    %v1898 = vpack.c.b16 %v1338, %v1330
    %v1899 = vpack.c.b16 %v1339, %v1331
    %v1900 = vpack.c.b16 %v1340, %v1332
    %v1901 = vpack.c.b16 %v1349, %v1341
    %v1902 = vpack.c.b16 %v1350, %v1342
    %v1903 = vpack.c.b16 %v1351, %v1343
    %v1904 = vpack.c.b16 %v1352, %v1344
    %v1905 = vpack.c.b16 %v1353, %v1345
    %v1906 = vpack.c.b16 %v1354, %v1346
    %v1907 = vpack.c.b16 %v1355, %v1347
    %v1908 = vpack.c.b16 %v1356, %v1348
    %v1909 = vpack.c.b16 %v1365, %v1357
    %v1910 = vpack.c.b16 %v1366, %v1358
    %v1911 = vpack.c.b16 %v1367, %v1359
    %v1912 = vpack.c.b16 %v1368, %v1360
    %v1913 = vpack.c.b16 %v1369, %v1361
    %v1914 = vpack.c.b16 %v1370, %v1362
    %v1915 = vpack.c.b16 %v1371, %v1363
    %v1916 = vpack.c.b16 %v1372, %v1364
    %v1917 = vpack.c.b16 %v1381, %v1373
    %v1918 = vpack.c.b16 %v1382, %v1374
    %v1919 = vpack.c.b16 %v1383, %v1375
    %v1920 = vpack.c.b16 %v1384, %v1376
    %v1921 = vpack.c.b16 %v1385, %v1377
    %v1922 = vpack.c.b16 %v1386, %v1378
    %v1923 = vpack.c.b16 %v1387, %v1379
    %v1924 = vpack.c.b16 %v1388, %v1380
    %v1925 = vpack.c.b16 %v1397, %v1389
    %v1926 = vpack.c.b16 %v1398, %v1390
    %v1927 = vpack.c.b16 %v1399, %v1391
    %v1928 = vpack.c.b16 %v1400, %v1392
    %v1929 = vpack.c.b16 %v1401, %v1393
    %v1930 = vpack.c.b16 %v1402, %v1394
    %v1931 = vpack.c.b16 %v1403, %v1395
    %v1932 = vpack.c.b16 %v1404, %v1396
    %v1933 = vpack.c.b16 %v1413, %v1405
    %v1934 = vpack.c.b16 %v1414, %v1406
    %v1935 = vpack.c.b16 %v1415, %v1407
    %v1936 = vpack.c.b16 %v1416, %v1408
    %v1937 = vpack.c.b16 %v1417, %v1409
    %v1938 = vpack.c.b16 %v1418, %v1410
    %v1939 = vpack.c.b16 %v1419, %v1411
    %v1940 = vpack.c.b16 %v1420, %v1412
    %v1941 = vpack.c.b16 %v1429, %v1421
    %v1942 = vpack.c.b16 %v1430, %v1422
    %v1943 = vpack.c.b16 %v1431, %v1423
    %v1944 = vpack.c.b16 %v1432, %v1424
    %v1945 = vpack.c.b16 %v1433, %v1425
    %v1946 = vpack.c.b16 %v1434, %v1426
    %v1947 = vpack.c.b16 %v1435, %v1427
    %v1948 = vpack.c.b16 %v1436, %v1428
    %v1949 = vpack.c.b16 %v1445, %v1437
    %v1950 = vpack.c.b16 %v1446, %v1438
    %v1951 = vpack.c.b16 %v1447, %v1439
    %v1952 = vpack.c.b16 %v1448, %v1440
    %v1953 = vpack.c.b16 %v1449, %v1441
    %v1954 = vpack.c.b16 %v1450, %v1442
    %v1955 = vpack.c.b16 %v1451, %v1443
    %v1956 = vpack.c.b16 %v1452, %v1444
    %v1957 = vpack.c.b16 %v1461, %v1453
    %v1958 = vpack.c.b16 %v1462, %v1454
    %v1959 = vpack.c.b16 %v1463, %v1455
    %v1960 = vpack.c.b16 %v1464, %v1456
    %v1961 = vpack.c.b16 %v1465, %v1457
    %v1962 = vpack.c.b16 %v1466, %v1458
    %v1963 = vpack.c.b16 %v1467, %v1459
    %v1964 = vpack.c.b16 %v1468, %v1460
    %v1965 = vpack.c.b16 %v1477, %v1469
    %v1966 = vpack.c.b16 %v1478, %v1470
    %v1967 = vpack.c.b16 %v1479, %v1471
    %v1968 = vpack.c.b16 %v1480, %v1472
    %v1969 = vpack.c.b16 %v1481, %v1473
    %v1970 = vpack.c.b16 %v1482, %v1474
    %v1971 = vpack.c.b16 %v1483, %v1475
    %v1972 = vpack.c.b16 %v1484, %v1476
    %v1973 = vpack.c.b16 %v1493, %v1485
    %v1974 = vpack.c.b16 %v1494, %v1486
    %v1975 = vpack.c.b16 %v1495, %v1487
    %v1976 = vpack.c.b16 %v1496, %v1488
    %v1977 = vpack.c.b16 %v1497, %v1489
    %v1978 = vpack.c.b16 %v1498, %v1490
    %v1979 = vpack.c.b16 %v1499, %v1491
    %v1980 = vpack.c.b16 %v1500, %v1492
    %v1981 = vpack.c.b16 %v1509, %v1501
    %v1982 = vpack.c.b16 %v1510, %v1502
    %v1983 = vpack.c.b16 %v1511, %v1503
    %v1984 = vpack.c.b16 %v1512, %v1504
    %v1985 = vpack.c.b16 %v1513, %v1505
    %v1986 = vpack.c.b16 %v1514, %v1506
    %v1987 = vpack.c.b16 %v1515, %v1507
    %v1988 = vpack.c.b16 %v1516, %v1508
    %v1989 = vpack.c.b16 %v1525, %v1517
    %v1990 = vpack.c.b16 %v1526, %v1518
    %v1991 = vpack.c.b16 %v1527, %v1519
    %v1992 = vpack.c.b16 %v1528, %v1520
    %v1993 = vpack.c.b16 %v1529, %v1521
    %v1994 = vpack.c.b16 %v1530, %v1522
    %v1995 = vpack.c.b16 %v1531, %v1523
    %v1996 = vpack.c.b16 %v1532, %v1524
    %v1997 = vpack.c.b16 %v1541, %v1533
    %v1998 = vpack.c.b16 %v1542, %v1534
    %v1999 = vpack.c.b16 %v1543, %v1535
    %v2000 = vpack.c.b16 %v1544, %v1536
    %v2001 = vpack.c.b16 %v1545, %v1537
    %v2002 = vpack.c.b16 %v1546, %v1538
    %v2003 = vpack.c.b16 %v1547, %v1539
    %v2004 = vpack.c.b16 %v1548, %v1540
    %v2005 = vpack.c.b16 %v1557, %v1549
    %v2006 = vpack.c.b16 %v1558, %v1550
    %v2007 = vpack.c.b16 %v1559, %v1551
    %v2008 = vpack.c.b16 %v1560, %v1552
    %v2009 = vpack.c.b16 %v1561, %v1553
    %v2010 = vpack.c.b16 %v1562, %v1554
    %v2011 = vpack.c.b16 %v1563, %v1555
    %v2012 = vpack.c.b16 %v1564, %v1556
    %v2013 = vpack.c.b16 %v1573, %v1565
    %v2014 = vpack.c.b16 %v1574, %v1566
    %v2015 = vpack.c.b16 %v1575, %v1567
    %v2016 = vpack.c.b16 %v1576, %v1568
    %v2017 = vpack.c.b16 %v1577, %v1569
    %v2018 = vpack.c.b16 %v1578, %v1570
    %v2019 = vpack.c.b16 %v1579, %v1571
    %v2020 = vpack.c.b16 %v1580, %v1572
    %v2021 = vpack.c.b16 %v1589, %v1581
    %v2022 = vpack.c.b16 %v1590, %v1582
    %v2023 = vpack.c.b16 %v1591, %v1583
    %v2024 = vpack.c.b16 %v1592, %v1584
    %v2025 = vpack.c.b16 %v1593, %v1585
    %v2026 = vpack.c.b16 %v1594, %v1586
    %v2027 = vpack.c.b16 %v1595, %v1587
    %v2028 = vpack.c.b16 %v1596, %v1588
    %v2029 = vpack.c.b16 %v1605, %v1597
    %v2030 = vpack.c.b16 %v1606, %v1598
    %v2031 = vpack.c.b16 %v1607, %v1599
    %v2032 = vpack.c.b16 %v1608, %v1600
    %v2033 = vpack.c.b16 %v1609, %v1601
    %v2034 = vpack.c.b16 %v1610, %v1602
    %v2035 = vpack.c.b16 %v1611, %v1603
    %v2036 = vpack.c.b16 %v1612, %v1604
    %v2037 = vpack.c.b16 %v1621, %v1613
    %v2038 = vpack.c.b16 %v1622, %v1614
    %v2039 = vpack.c.b16 %v1623, %v1615
    %v2040 = vpack.c.b16 %v1624, %v1616
    %v2041 = vpack.c.b16 %v1625, %v1617
    %v2042 = vpack.c.b16 %v1626, %v1618
    %v2043 = vpack.c.b16 %v1627, %v1619
    %v2044 = vpack.c.b16 %v1628, %v1620
    %v2045 = vpack.c.b16 %v1637, %v1629
    %v2046 = vpack.c.b16 %v1638, %v1630
    %v2047 = vpack.c.b16 %v1639, %v1631
    %v2048 = vpack.c.b16 %v1640, %v1632
    %v2049 = vpack.c.b16 %v1641, %v1633
    %v2050 = vpack.c.b16 %v1642, %v1634
    %v2051 = vpack.c.b16 %v1643, %v1635
    %v2052 = vpack.c.b16 %v1644, %v1636
    %v2053 = vpack.c.b16 %v1653, %v1645
    %v2054 = vpack.c.b16 %v1654, %v1646
    %v2055 = vpack.c.b16 %v1655, %v1647
    %v2056 = vpack.c.b16 %v1656, %v1648
    %v2057 = vpack.c.b16 %v1657, %v1649
    %v2058 = vpack.c.b16 %v1658, %v1650
    %v2059 = vpack.c.b16 %v1659, %v1651
    %v2060 = vpack.c.b16 %v1660, %v1652
    %v2061 = vpack.c.b16 %v1669, %v1661
    %v2062 = vpack.c.b16 %v1670, %v1662
    %v2063 = vpack.c.b16 %v1671, %v1663
    %v2064 = vpack.c.b16 %v1672, %v1664
    %v2065 = vpack.c.b16 %v1673, %v1665
    %v2066 = vpack.c.b16 %v1674, %v1666
    %v2067 = vpack.c.b16 %v1675, %v1667
    %v2068 = vpack.c.b16 %v1676, %v1668
    %v2069 = vpack.c.b16 %v1685, %v1677
    %v2070 = vpack.c.b16 %v1686, %v1678
    %v2071 = vpack.c.b16 %v1687, %v1679
    %v2072 = vpack.c.b16 %v1688, %v1680
    %v2073 = vpack.c.b16 %v1689, %v1681
    %v2074 = vpack.c.b16 %v1690, %v1682
    %v2075 = vpack.c.b16 %v1691, %v1683
    %v2076 = vpack.c.b16 %v1692, %v1684
    %2461 = vmatprep.subr.bf16.mxu0 %v1750
    %2462 = vmatpush1.bf16.msra.mxu0 %v1749
    %2463 = vmatprep.subr.bf16.mxu0 %v1742
    %2464 = vmatpush1.bf16.msra.mxu0 %v1741
    %2465 = vmatprep.subr.bf16.mxu0 %v1734
    %2466 = vmatpush1.bf16.msra.mxu0 %v1733
    %2467 = vmatprep.subr.bf16.mxu0 %v1726
    %2468 = vmatpush1.bf16.msra.mxu0 %v1725
    %2469 = vmatprep.subr.bf16.mxu0 %v1718
    %2470 = vmatpush1.bf16.msra.mxu0 %v1717
    %2471 = vmatprep.subr.bf16.mxu0 %v1710
    %2472 = vmatpush1.bf16.msra.mxu0 %v1709
    %2473 = vmatprep.subr.bf16.mxu0 %v1702
    %2474 = vmatpush1.bf16.msra.mxu0 %v1701
    %2475 = vmatprep.subr.bf16.mxu0 %v1694
    %2476 = vmatpush1.bf16.msra.mxu0 %v1693
    %2477 = vmatprep.subr.bf16.mxu0 %v1814
    %2478 = vmatpush2.bf16.msra.mxu0 %v1813
    %2479 = vmatprep.subr.bf16.mxu0 %v1806
    %2480 = vmatpush2.bf16.msra.mxu0 %v1805
    %2481 = vmatprep.subr.bf16.mxu0 %v1798
    %2482 = vmatpush2.bf16.msra.mxu0 %v1797
    %2483 = vmatprep.subr.bf16.mxu0 %v1790
    %2484 = vmatpush2.bf16.msra.mxu0 %v1789
    %2485 = vmatprep.subr.bf16.mxu0 %v1782
    %2486 = vmatpush2.bf16.msra.mxu0 %v1781
    %2487 = vmatprep.subr.bf16.mxu0 %v1774
    %2488 = vmatpush2.bf16.msra.mxu0 %v1773
    %2489 = vmatprep.subr.bf16.mxu0 %v1766
    %2490 = vmatpush2.bf16.msra.mxu0 %v1765
    %2491 = vmatprep.subr.bf16.mxu0 %v1758
    %2492 = vmatpush2.bf16.msra.mxu0 %v1757
    %2493 = vmatprep.mubr.bf16.mxu0 %v110
    %2494 = vmatmul.mubr.bf16.gmra.mxu0 %v109
    %v2495 = vpop.f32.mrf.mxu0
    %v2496 = vadd.f32 %v504, %v2495
    %v2497 = vpop.f32.mrf.mxu0
    %v2498 = vadd.f32 %v508, %v2497
    %v2499 = vpop.f32.mrf.mxu0
    %v2500 = vpop.f32.mrf.mxu0
    %2501 = vdwg.mxu0
    %2502 = vmatprep.subr.bf16.mxu0 %v1878
    %2503 = vmatpush1.bf16.msra.mxu0 %v1877
    %2504 = vmatprep.subr.bf16.mxu0 %v1870
    %2505 = vmatpush1.bf16.msra.mxu0 %v1869
    %2506 = vmatprep.subr.bf16.mxu0 %v1862
    %2507 = vmatpush1.bf16.msra.mxu0 %v1861
    %2508 = vmatprep.subr.bf16.mxu0 %v1854
    %2509 = vmatpush1.bf16.msra.mxu0 %v1853
    %2510 = vmatprep.subr.bf16.mxu0 %v1846
    %2511 = vmatpush1.bf16.msra.mxu0 %v1845
    %2512 = vmatprep.subr.bf16.mxu0 %v1838
    %2513 = vmatpush1.bf16.msra.mxu0 %v1837
    %2514 = vmatprep.subr.bf16.mxu0 %v1830
    %2515 = vmatpush1.bf16.msra.mxu0 %v1829
    %2516 = vmatprep.subr.bf16.mxu0 %v1822
    %2517 = vmatpush1.bf16.msra.mxu0 %v1821
    %2518 = vmatprep.subr.bf16.mxu0 %v1942
    %2519 = vmatpush2.bf16.msra.mxu0 %v1941
    %2520 = vmatprep.subr.bf16.mxu0 %v1934
    %2521 = vmatpush2.bf16.msra.mxu0 %v1933
    %2522 = vmatprep.subr.bf16.mxu0 %v1926
    %2523 = vmatpush2.bf16.msra.mxu0 %v1925
    %2524 = vmatprep.subr.bf16.mxu0 %v1918
    %2525 = vmatpush2.bf16.msra.mxu0 %v1917
    %2526 = vmatprep.subr.bf16.mxu0 %v1910
    %2527 = vmatpush2.bf16.msra.mxu0 %v1909
    %2528 = vmatprep.subr.bf16.mxu0 %v1902
    %2529 = vmatpush2.bf16.msra.mxu0 %v1901
    %2530 = vmatprep.subr.bf16.mxu0 %v1894
    %2531 = vmatpush2.bf16.msra.mxu0 %v1893
    %2532 = vmatprep.subr.bf16.mxu0 %v1886
    %2533 = vmatpush2.bf16.msra.mxu0 %v1885
    %2534 = vmatprep.mubr.bf16.mxu0 %v112
    %2535 = vmatmul.mubr.bf16.gmra.mxu0 %v111
    %v2536 = vpop.f32.mrf.mxu0
    %v2537 = vadd.f32 %v2496, %v2536
    %v2538 = vpop.f32.mrf.mxu0
    %v2539 = vadd.f32 %v2498, %v2538
    %v2540 = vpop.f32.mrf.mxu0
    %v2541 = vpop.f32.mrf.mxu0
    %2542 = vdwg.mxu0
    %2543 = vmatprep.subr.bf16.mxu0 %v2006
    %2544 = vmatpush1.bf16.msra.mxu0 %v2005
    %2545 = vmatprep.subr.bf16.mxu0 %v1998
    %2546 = vmatpush1.bf16.msra.mxu0 %v1997
    %2547 = vmatprep.subr.bf16.mxu0 %v1990
    %2548 = vmatpush1.bf16.msra.mxu0 %v1989
    %2549 = vmatprep.subr.bf16.mxu0 %v1982
    %2550 = vmatpush1.bf16.msra.mxu0 %v1981
    %2551 = vmatprep.subr.bf16.mxu0 %v1974
    %2552 = vmatpush1.bf16.msra.mxu0 %v1973
    %2553 = vmatprep.subr.bf16.mxu0 %v1966
    %2554 = vmatpush1.bf16.msra.mxu0 %v1965
    %2555 = vmatprep.subr.bf16.mxu0 %v1958
    %2556 = vmatpush1.bf16.msra.mxu0 %v1957
    %2557 = vmatprep.subr.bf16.mxu0 %v1950
    %2558 = vmatpush1.bf16.msra.mxu0 %v1949
    %2559 = vmatprep.subr.bf16.mxu0 %v2070
    %2560 = vmatpush2.bf16.msra.mxu0 %v2069
    %2561 = vmatprep.subr.bf16.mxu0 %v2062
    %2562 = vmatpush2.bf16.msra.mxu0 %v2061
    %2563 = vmatprep.subr.bf16.mxu0 %v2054
    %2564 = vmatpush2.bf16.msra.mxu0 %v2053
    %2565 = vmatprep.subr.bf16.mxu0 %v2046
    %2566 = vmatpush2.bf16.msra.mxu0 %v2045
    %2567 = vmatprep.subr.bf16.mxu0 %v2038
    %2568 = vmatpush2.bf16.msra.mxu0 %v2037
    %2569 = vmatprep.subr.bf16.mxu0 %v2030
    %2570 = vmatpush2.bf16.msra.mxu0 %v2029
    %2571 = vmatprep.subr.bf16.mxu0 %v2022
    %2572 = vmatpush2.bf16.msra.mxu0 %v2021
    %2573 = vmatprep.subr.bf16.mxu0 %v2014
    %2574 = vmatpush2.bf16.msra.mxu0 %v2013
    %2575 = vmatprep.mubr.bf16.mxu0 %v114
    %2576 = vmatmul.mubr.bf16.gmra.mxu0 %v113
    %v2577 = vpop.f32.mrf.mxu0
    %v2578 = vadd.f32 %v2537, %v2577
    %v2579 = vpop.f32.mrf.mxu0
    %v2580 = vadd.f32 %v2539, %v2579
    %v2581 = vpop.f32.mrf.mxu0
    %v2582 = vpop.f32.mrf.mxu0
    %2583 = vdwg.mxu0
    %2584 = vmatprep.subr.bf16.mxu0 %v1752
    %2585 = vmatpush1.bf16.msra.mxu0 %v1751
    %2586 = vmatprep.subr.bf16.mxu0 %v1744
    %2587 = vmatpush1.bf16.msra.mxu0 %v1743
    %2588 = vmatprep.subr.bf16.mxu0 %v1736
    %2589 = vmatpush1.bf16.msra.mxu0 %v1735
    %2590 = vmatprep.subr.bf16.mxu0 %v1728
    %2591 = vmatpush1.bf16.msra.mxu0 %v1727
    %2592 = vmatprep.subr.bf16.mxu0 %v1720
    %2593 = vmatpush1.bf16.msra.mxu0 %v1719
    %2594 = vmatprep.subr.bf16.mxu0 %v1712
    %2595 = vmatpush1.bf16.msra.mxu0 %v1711
    %2596 = vmatprep.subr.bf16.mxu0 %v1704
    %2597 = vmatpush1.bf16.msra.mxu0 %v1703
    %2598 = vmatprep.subr.bf16.mxu0 %v1696
    %2599 = vmatpush1.bf16.msra.mxu0 %v1695
    %2600 = vmatprep.subr.bf16.mxu0 %v1816
    %2601 = vmatpush2.bf16.msra.mxu0 %v1815
    %2602 = vmatprep.subr.bf16.mxu0 %v1808
    %2603 = vmatpush2.bf16.msra.mxu0 %v1807
    %2604 = vmatprep.subr.bf16.mxu0 %v1800
    %2605 = vmatpush2.bf16.msra.mxu0 %v1799
    %2606 = vmatprep.subr.bf16.mxu0 %v1792
    %2607 = vmatpush2.bf16.msra.mxu0 %v1791
    %2608 = vmatprep.subr.bf16.mxu0 %v1784
    %2609 = vmatpush2.bf16.msra.mxu0 %v1783
    %2610 = vmatprep.subr.bf16.mxu0 %v1776
    %2611 = vmatpush2.bf16.msra.mxu0 %v1775
    %2612 = vmatprep.subr.bf16.mxu0 %v1768
    %2613 = vmatpush2.bf16.msra.mxu0 %v1767
    %2614 = vmatprep.subr.bf16.mxu0 %v1760
    %2615 = vmatpush2.bf16.msra.mxu0 %v1759
    %2616 = vmatprep.mubr.bf16.mxu0 %v110
    %2617 = vmatmul.mubr.bf16.gmra.mxu0 %v109
    %v2618 = vpop.f32.mrf.mxu0
    %v2619 = vadd.f32 %v512, %v2618
    %v2620 = vpop.f32.mrf.mxu0
    %v2621 = vadd.f32 %v516, %v2620
    %v2622 = vpop.f32.mrf.mxu0
    %v2623 = vpop.f32.mrf.mxu0
    %2624 = vdwg.mxu0
    %2625 = vmatprep.subr.bf16.mxu0 %v1880
    %2626 = vmatpush1.bf16.msra.mxu0 %v1879
    %2627 = vmatprep.subr.bf16.mxu0 %v1872
    %2628 = vmatpush1.bf16.msra.mxu0 %v1871
    %2629 = vmatprep.subr.bf16.mxu0 %v1864
    %2630 = vmatpush1.bf16.msra.mxu0 %v1863
    %2631 = vmatprep.subr.bf16.mxu0 %v1856
    %2632 = vmatpush1.bf16.msra.mxu0 %v1855
    %2633 = vmatprep.subr.bf16.mxu0 %v1848
    %2634 = vmatpush1.bf16.msra.mxu0 %v1847
    %2635 = vmatprep.subr.bf16.mxu0 %v1840
    %2636 = vmatpush1.bf16.msra.mxu0 %v1839
    %2637 = vmatprep.subr.bf16.mxu0 %v1832
    %2638 = vmatpush1.bf16.msra.mxu0 %v1831
    %2639 = vmatprep.subr.bf16.mxu0 %v1824
    %2640 = vmatpush1.bf16.msra.mxu0 %v1823
    %2641 = vmatprep.subr.bf16.mxu0 %v1944
    %2642 = vmatpush2.bf16.msra.mxu0 %v1943
    %2643 = vmatprep.subr.bf16.mxu0 %v1936
    %2644 = vmatpush2.bf16.msra.mxu0 %v1935
    %2645 = vmatprep.subr.bf16.mxu0 %v1928
    %2646 = vmatpush2.bf16.msra.mxu0 %v1927
    %2647 = vmatprep.subr.bf16.mxu0 %v1920
    %2648 = vmatpush2.bf16.msra.mxu0 %v1919
    %2649 = vmatprep.subr.bf16.mxu0 %v1912
    %2650 = vmatpush2.bf16.msra.mxu0 %v1911
    %2651 = vmatprep.subr.bf16.mxu0 %v1904
    %2652 = vmatpush2.bf16.msra.mxu0 %v1903
    %2653 = vmatprep.subr.bf16.mxu0 %v1896
    %2654 = vmatpush2.bf16.msra.mxu0 %v1895
    %2655 = vmatprep.subr.bf16.mxu0 %v1888
    %2656 = vmatpush2.bf16.msra.mxu0 %v1887
    %2657 = vmatprep.mubr.bf16.mxu0 %v112
    %2658 = vmatmul.mubr.bf16.gmra.mxu0 %v111
    %v2659 = vpop.f32.mrf.mxu0
    %v2660 = vadd.f32 %v2619, %v2659
    %v2661 = vpop.f32.mrf.mxu0
    %v2662 = vadd.f32 %v2621, %v2661
    %v2663 = vpop.f32.mrf.mxu0
    %v2664 = vpop.f32.mrf.mxu0
    %2665 = vdwg.mxu0
    %2666 = vmatprep.subr.bf16.mxu0 %v2008
    %2667 = vmatpush1.bf16.msra.mxu0 %v2007
    %2668 = vmatprep.subr.bf16.mxu0 %v2000
    %2669 = vmatpush1.bf16.msra.mxu0 %v1999
    %2670 = vmatprep.subr.bf16.mxu0 %v1992
    %2671 = vmatpush1.bf16.msra.mxu0 %v1991
    %2672 = vmatprep.subr.bf16.mxu0 %v1984
    %2673 = vmatpush1.bf16.msra.mxu0 %v1983
    %2674 = vmatprep.subr.bf16.mxu0 %v1976
    %2675 = vmatpush1.bf16.msra.mxu0 %v1975
    %2676 = vmatprep.subr.bf16.mxu0 %v1968
    %2677 = vmatpush1.bf16.msra.mxu0 %v1967
    %2678 = vmatprep.subr.bf16.mxu0 %v1960
    %2679 = vmatpush1.bf16.msra.mxu0 %v1959
    %2680 = vmatprep.subr.bf16.mxu0 %v1952
    %2681 = vmatpush1.bf16.msra.mxu0 %v1951
    %2682 = vmatprep.subr.bf16.mxu0 %v2072
    %2683 = vmatpush2.bf16.msra.mxu0 %v2071
    %2684 = vmatprep.subr.bf16.mxu0 %v2064
    %2685 = vmatpush2.bf16.msra.mxu0 %v2063
    %2686 = vmatprep.subr.bf16.mxu0 %v2056
    %2687 = vmatpush2.bf16.msra.mxu0 %v2055
    %2688 = vmatprep.subr.bf16.mxu0 %v2048
    %2689 = vmatpush2.bf16.msra.mxu0 %v2047
    %2690 = vmatprep.subr.bf16.mxu0 %v2040
    %2691 = vmatpush2.bf16.msra.mxu0 %v2039
    %2692 = vmatprep.subr.bf16.mxu0 %v2032
    %2693 = vmatpush2.bf16.msra.mxu0 %v2031
    %2694 = vmatprep.subr.bf16.mxu0 %v2024
    %2695 = vmatpush2.bf16.msra.mxu0 %v2023
    %2696 = vmatprep.subr.bf16.mxu0 %v2016
    %2697 = vmatpush2.bf16.msra.mxu0 %v2015
    %2698 = vmatprep.mubr.bf16.mxu0 %v114
    %2699 = vmatmul.mubr.bf16.gmra.mxu0 %v113
    %v2700 = vpop.f32.mrf.mxu0
    %v2701 = vadd.f32 %v2660, %v2700
    %v2702 = vpop.f32.mrf.mxu0
    %v2703 = vadd.f32 %v2662, %v2702
    %v2704 = vpop.f32.mrf.mxu0
    %v2705 = vpop.f32.mrf.mxu0
    %2706 = vdwg.mxu0
    %2707 = vmatprep.subr.bf16.mxu0 %v1754
    %2708 = vmatpush1.bf16.msra.mxu0 %v1753
    %2709 = vmatprep.subr.bf16.mxu0 %v1746
    %2710 = vmatpush1.bf16.msra.mxu0 %v1745
    %2711 = vmatprep.subr.bf16.mxu0 %v1738
    %2712 = vmatpush1.bf16.msra.mxu0 %v1737
    %2713 = vmatprep.subr.bf16.mxu0 %v1730
    %2714 = vmatpush1.bf16.msra.mxu0 %v1729
    %2715 = vmatprep.subr.bf16.mxu0 %v1722
    %2716 = vmatpush1.bf16.msra.mxu0 %v1721
    %2717 = vmatprep.subr.bf16.mxu0 %v1714
    %2718 = vmatpush1.bf16.msra.mxu0 %v1713
    %2719 = vmatprep.subr.bf16.mxu0 %v1706
    %2720 = vmatpush1.bf16.msra.mxu0 %v1705
    %2721 = vmatprep.subr.bf16.mxu0 %v1698
    %2722 = vmatpush1.bf16.msra.mxu0 %v1697
    %2723 = vmatprep.subr.bf16.mxu0 %v1818
    %2724 = vmatpush2.bf16.msra.mxu0 %v1817
    %2725 = vmatprep.subr.bf16.mxu0 %v1810
    %2726 = vmatpush2.bf16.msra.mxu0 %v1809
    %2727 = vmatprep.subr.bf16.mxu0 %v1802
    %2728 = vmatpush2.bf16.msra.mxu0 %v1801
    %2729 = vmatprep.subr.bf16.mxu0 %v1794
    %2730 = vmatpush2.bf16.msra.mxu0 %v1793
    %2731 = vmatprep.subr.bf16.mxu0 %v1786
    %2732 = vmatpush2.bf16.msra.mxu0 %v1785
    %2733 = vmatprep.subr.bf16.mxu0 %v1778
    %2734 = vmatpush2.bf16.msra.mxu0 %v1777
    %2735 = vmatprep.subr.bf16.mxu0 %v1770
    %2736 = vmatpush2.bf16.msra.mxu0 %v1769
    %2737 = vmatprep.subr.bf16.mxu0 %v1762
    %2738 = vmatpush2.bf16.msra.mxu0 %v1761
    %2739 = vmatprep.mubr.bf16.mxu0 %v110
    %2740 = vmatmul.mubr.bf16.gmra.mxu0 %v109
    %v2741 = vpop.f32.mrf.mxu0
    %v2742 = vadd.f32 %v520, %v2741
    %v2743 = vpop.f32.mrf.mxu0
    %v2744 = vadd.f32 %v524, %v2743
    %v2745 = vpop.f32.mrf.mxu0
    %v2746 = vpop.f32.mrf.mxu0
    %2747 = vdwg.mxu0
    %2748 = vmatprep.subr.bf16.mxu0 %v1882
    %2749 = vmatpush1.bf16.msra.mxu0 %v1881
    %2750 = vmatprep.subr.bf16.mxu0 %v1874
    %2751 = vmatpush1.bf16.msra.mxu0 %v1873
    %2752 = vmatprep.subr.bf16.mxu0 %v1866
    %2753 = vmatpush1.bf16.msra.mxu0 %v1865
    %2754 = vmatprep.subr.bf16.mxu0 %v1858
    %2755 = vmatpush1.bf16.msra.mxu0 %v1857
    %2756 = vmatprep.subr.bf16.mxu0 %v1850
    %2757 = vmatpush1.bf16.msra.mxu0 %v1849
    %2758 = vmatprep.subr.bf16.mxu0 %v1842
    %2759 = vmatpush1.bf16.msra.mxu0 %v1841
    %2760 = vmatprep.subr.bf16.mxu0 %v1834
    %2761 = vmatpush1.bf16.msra.mxu0 %v1833
    %2762 = vmatprep.subr.bf16.mxu0 %v1826
    %2763 = vmatpush1.bf16.msra.mxu0 %v1825
    %2764 = vmatprep.subr.bf16.mxu0 %v1946
    %2765 = vmatpush2.bf16.msra.mxu0 %v1945
    %2766 = vmatprep.subr.bf16.mxu0 %v1938
    %2767 = vmatpush2.bf16.msra.mxu0 %v1937
    %2768 = vmatprep.subr.bf16.mxu0 %v1930
    %2769 = vmatpush2.bf16.msra.mxu0 %v1929
    %2770 = vmatprep.subr.bf16.mxu0 %v1922
    %2771 = vmatpush2.bf16.msra.mxu0 %v1921
    %2772 = vmatprep.subr.bf16.mxu0 %v1914
    %2773 = vmatpush2.bf16.msra.mxu0 %v1913
    %2774 = vmatprep.subr.bf16.mxu0 %v1906
    %2775 = vmatpush2.bf16.msra.mxu0 %v1905
    %2776 = vmatprep.subr.bf16.mxu0 %v1898
    %2777 = vmatpush2.bf16.msra.mxu0 %v1897
    %2778 = vmatprep.subr.bf16.mxu0 %v1890
    %2779 = vmatpush2.bf16.msra.mxu0 %v1889
    %2780 = vmatprep.mubr.bf16.mxu0 %v112
    %2781 = vmatmul.mubr.bf16.gmra.mxu0 %v111
    %v2782 = vpop.f32.mrf.mxu0
    %v2783 = vadd.f32 %v2742, %v2782
    %v2784 = vpop.f32.mrf.mxu0
    %v2785 = vadd.f32 %v2744, %v2784
    %v2786 = vpop.f32.mrf.mxu0
    %v2787 = vpop.f32.mrf.mxu0
    %2788 = vdwg.mxu0
    %2789 = vmatprep.subr.bf16.mxu0 %v2010
    %2790 = vmatpush1.bf16.msra.mxu0 %v2009
    %2791 = vmatprep.subr.bf16.mxu0 %v2002
    %2792 = vmatpush1.bf16.msra.mxu0 %v2001
    %2793 = vmatprep.subr.bf16.mxu0 %v1994
    %2794 = vmatpush1.bf16.msra.mxu0 %v1993
    %2795 = vmatprep.subr.bf16.mxu0 %v1986
    %2796 = vmatpush1.bf16.msra.mxu0 %v1985
    %2797 = vmatprep.subr.bf16.mxu0 %v1978
    %2798 = vmatpush1.bf16.msra.mxu0 %v1977
    %2799 = vmatprep.subr.bf16.mxu0 %v1970
    %2800 = vmatpush1.bf16.msra.mxu0 %v1969
    %2801 = vmatprep.subr.bf16.mxu0 %v1962
    %2802 = vmatpush1.bf16.msra.mxu0 %v1961
    %2803 = vmatprep.subr.bf16.mxu0 %v1954
    %2804 = vmatpush1.bf16.msra.mxu0 %v1953
    %2805 = vmatprep.subr.bf16.mxu0 %v2074
    %2806 = vmatpush2.bf16.msra.mxu0 %v2073
    %2807 = vmatprep.subr.bf16.mxu0 %v2066
    %2808 = vmatpush2.bf16.msra.mxu0 %v2065
    %2809 = vmatprep.subr.bf16.mxu0 %v2058
    %2810 = vmatpush2.bf16.msra.mxu0 %v2057
    %2811 = vmatprep.subr.bf16.mxu0 %v2050
    %2812 = vmatpush2.bf16.msra.mxu0 %v2049
    %2813 = vmatprep.subr.bf16.mxu0 %v2042
    %2814 = vmatpush2.bf16.msra.mxu0 %v2041
    %2815 = vmatprep.subr.bf16.mxu0 %v2034
    %2816 = vmatpush2.bf16.msra.mxu0 %v2033
    %2817 = vmatprep.subr.bf16.mxu0 %v2026
    %2818 = vmatpush2.bf16.msra.mxu0 %v2025
    %2819 = vmatprep.subr.bf16.mxu0 %v2018
    %2820 = vmatpush2.bf16.msra.mxu0 %v2017
    %2821 = vmatprep.mubr.bf16.mxu0 %v114
    %2822 = vmatmul.mubr.bf16.gmra.mxu0 %v113
    %v2823 = vpop.f32.mrf.mxu0
    %v2824 = vadd.f32 %v2783, %v2823
    %v2825 = vpop.f32.mrf.mxu0
    %v2826 = vadd.f32 %v2785, %v2825
    %v2827 = vpop.f32.mrf.mxu0
    %v2828 = vpop.f32.mrf.mxu0
    %2829 = vdwg.mxu0
    %2830 = vmatprep.subr.bf16.mxu0 %v1756
    %2831 = vmatpush1.bf16.msra.mxu0 %v1755
    %2832 = vmatprep.subr.bf16.mxu0 %v1748
    %2833 = vmatpush1.bf16.msra.mxu0 %v1747
    %2834 = vmatprep.subr.bf16.mxu0 %v1740
    %2835 = vmatpush1.bf16.msra.mxu0 %v1739
    %2836 = vmatprep.subr.bf16.mxu0 %v1732
    %2837 = vmatpush1.bf16.msra.mxu0 %v1731
    %2838 = vmatprep.subr.bf16.mxu0 %v1724
    %2839 = vmatpush1.bf16.msra.mxu0 %v1723
    %2840 = vmatprep.subr.bf16.mxu0 %v1716
    %2841 = vmatpush1.bf16.msra.mxu0 %v1715
    %2842 = vmatprep.subr.bf16.mxu0 %v1708
    %2843 = vmatpush1.bf16.msra.mxu0 %v1707
    %2844 = vmatprep.subr.bf16.mxu0 %v1700
    %2845 = vmatpush1.bf16.msra.mxu0 %v1699
    %2846 = vmatprep.subr.bf16.mxu0 %v1820
    %2847 = vmatpush2.bf16.msra.mxu0 %v1819
    %2848 = vmatprep.subr.bf16.mxu0 %v1812
    %2849 = vmatpush2.bf16.msra.mxu0 %v1811
    %2850 = vmatprep.subr.bf16.mxu0 %v1804
    %2851 = vmatpush2.bf16.msra.mxu0 %v1803
    %2852 = vmatprep.subr.bf16.mxu0 %v1796
    %2853 = vmatpush2.bf16.msra.mxu0 %v1795
    %2854 = vmatprep.subr.bf16.mxu0 %v1788
    %2855 = vmatpush2.bf16.msra.mxu0 %v1787
    %2856 = vmatprep.subr.bf16.mxu0 %v1780
    %2857 = vmatpush2.bf16.msra.mxu0 %v1779
    %2858 = vmatprep.subr.bf16.mxu0 %v1772
    %2859 = vmatpush2.bf16.msra.mxu0 %v1771
    %2860 = vmatprep.subr.bf16.mxu0 %v1764
    %2861 = vmatpush2.bf16.msra.mxu0 %v1763
    %2862 = vmatprep.mubr.bf16.mxu0 %v110
    %2863 = vmatmul.mubr.bf16.gmra.mxu0 %v109
    %v2864 = vpop.f32.mrf.mxu0
    %v2865 = vadd.f32 %v528, %v2864
    %v2866 = vpop.f32.mrf.mxu0
    %v2867 = vadd.f32 %v532, %v2866
    %v2868 = vpop.f32.mrf.mxu0
    %v2869 = vpop.f32.mrf.mxu0
    %2870 = vdwg.mxu0
    %2871 = vmatprep.subr.bf16.mxu0 %v1884
    %2872 = vmatpush1.bf16.msra.mxu0 %v1883
    %2873 = vmatprep.subr.bf16.mxu0 %v1876
    %2874 = vmatpush1.bf16.msra.mxu0 %v1875
    %2875 = vmatprep.subr.bf16.mxu0 %v1868
    %2876 = vmatpush1.bf16.msra.mxu0 %v1867
    %2877 = vmatprep.subr.bf16.mxu0 %v1860
    %2878 = vmatpush1.bf16.msra.mxu0 %v1859
    %2879 = vmatprep.subr.bf16.mxu0 %v1852
    %2880 = vmatpush1.bf16.msra.mxu0 %v1851
    %2881 = vmatprep.subr.bf16.mxu0 %v1844
    %2882 = vmatpush1.bf16.msra.mxu0 %v1843
    %2883 = vmatprep.subr.bf16.mxu0 %v1836
    %2884 = vmatpush1.bf16.msra.mxu0 %v1835
    %2885 = vmatprep.subr.bf16.mxu0 %v1828
    %2886 = vmatpush1.bf16.msra.mxu0 %v1827
    %2887 = vmatprep.subr.bf16.mxu0 %v1948
    %2888 = vmatpush2.bf16.msra.mxu0 %v1947
    %2889 = vmatprep.subr.bf16.mxu0 %v1940
    %2890 = vmatpush2.bf16.msra.mxu0 %v1939
    %2891 = vmatprep.subr.bf16.mxu0 %v1932
    %2892 = vmatpush2.bf16.msra.mxu0 %v1931
    %2893 = vmatprep.subr.bf16.mxu0 %v1924
    %2894 = vmatpush2.bf16.msra.mxu0 %v1923
    %2895 = vmatprep.subr.bf16.mxu0 %v1916
    %2896 = vmatpush2.bf16.msra.mxu0 %v1915
    %2897 = vmatprep.subr.bf16.mxu0 %v1908
    %2898 = vmatpush2.bf16.msra.mxu0 %v1907
    %2899 = vmatprep.subr.bf16.mxu0 %v1900
    %2900 = vmatpush2.bf16.msra.mxu0 %v1899
    %2901 = vmatprep.subr.bf16.mxu0 %v1892
    %2902 = vmatpush2.bf16.msra.mxu0 %v1891
    %2903 = vmatprep.mubr.bf16.mxu0 %v112
    %2904 = vmatmul.mubr.bf16.gmra.mxu0 %v111
    %v2905 = vpop.f32.mrf.mxu0
    %v2906 = vadd.f32 %v2865, %v2905
    %v2907 = vpop.f32.mrf.mxu0
    %v2908 = vadd.f32 %v2867, %v2907
    %v2909 = vpop.f32.mrf.mxu0
    %v2910 = vpop.f32.mrf.mxu0
    %2911 = vdwg.mxu0
    %2912 = vmatprep.subr.bf16.mxu0 %v2012
    %2913 = vmatpush1.bf16.msra.mxu0 %v2011
    %2914 = vmatprep.subr.bf16.mxu0 %v2004
    %2915 = vmatpush1.bf16.msra.mxu0 %v2003
    %2916 = vmatprep.subr.bf16.mxu0 %v1996
    %2917 = vmatpush1.bf16.msra.mxu0 %v1995
    %2918 = vmatprep.subr.bf16.mxu0 %v1988
    %2919 = vmatpush1.bf16.msra.mxu0 %v1987
    %2920 = vmatprep.subr.bf16.mxu0 %v1980
    %2921 = vmatpush1.bf16.msra.mxu0 %v1979
    %2922 = vmatprep.subr.bf16.mxu0 %v1972
    %2923 = vmatpush1.bf16.msra.mxu0 %v1971
    %2924 = vmatprep.subr.bf16.mxu0 %v1964
    %2925 = vmatpush1.bf16.msra.mxu0 %v1963
    %2926 = vmatprep.subr.bf16.mxu0 %v1956
    %2927 = vmatpush1.bf16.msra.mxu0 %v1955
    %2928 = vmatprep.subr.bf16.mxu0 %v2076
    %2929 = vmatpush2.bf16.msra.mxu0 %v2075
    %2930 = vmatprep.subr.bf16.mxu0 %v2068
    %2931 = vmatpush2.bf16.msra.mxu0 %v2067
    %2932 = vmatprep.subr.bf16.mxu0 %v2060
    %2933 = vmatpush2.bf16.msra.mxu0 %v2059
    %2934 = vmatprep.subr.bf16.mxu0 %v2052
    %2935 = vmatpush2.bf16.msra.mxu0 %v2051
    %2936 = vmatprep.subr.bf16.mxu0 %v2044
    %2937 = vmatpush2.bf16.msra.mxu0 %v2043
    %2938 = vmatprep.subr.bf16.mxu0 %v2036
    %2939 = vmatpush2.bf16.msra.mxu0 %v2035
    %2940 = vmatprep.subr.bf16.mxu0 %v2028
    %2941 = vmatpush2.bf16.msra.mxu0 %v2027
    %2942 = vmatprep.subr.bf16.mxu0 %v2020
    %2943 = vmatpush2.bf16.msra.mxu0 %v2019
    %2944 = vmatprep.mubr.bf16.mxu0 %v114
    %2945 = vmatmul.mubr.bf16.gmra.mxu0 %v113
    %v2946 = vpop.f32.mrf.mxu0
    %v2947 = vadd.f32 %v2906, %v2946
    %v2948 = vpop.f32.mrf.mxu0
    %v2949 = vadd.f32 %v2908, %v2948
    %v2950 = vpop.f32.mrf.mxu0
    %v2951 = vpop.f32.mrf.mxu0
    %2952 = vdwg.mxu0
    %v2953 = vpack.c.bf16 %v2578, %v2578
    %v2954 = vpack.c.bf16 %v2580, %v2580
    %v2955 = vpack.c.bf16 %v2701, %v2701
    %v2956 = vpack.c.bf16 %v2703, %v2703
    %v2957 = vpack.c.bf16 %v2824, %v2824
    %v2958 = vpack.c.bf16 %v2826, %v2826
    %v2959 = vpack.c.bf16 %v2947, %v2947
    %v2960 = vpack.c.bf16 %v2949, %v2949
    %v2961 = vld [vmem:[#allocation8] sm:$0xf]
    %v2962 = vld [vmem:[#allocation8 + $0x4] sm:$0xf]
    %v2963 = vld [vmem:[#allocation8 + $0x8] sm:$0xf]
    %v2964 = vld [vmem:[#allocation8 + $0xc] sm:$0xf]
    %v2965 = vld [vmem:[#allocation8 + $0x10] sm:$0xf]
    %v2966 = vld [vmem:[#allocation8 + $0x14] sm:$0xf]
    %v2967 = vld [vmem:[#allocation8 + $0x18] sm:$0xf]
    %v2968 = vld [vmem:[#allocation8 + $0x1c] sm:$0xf]
    %v2969 = vld [vmem:[#allocation8 + $0x20] sm:$0xf]
    %v2970 = vld [vmem:[#allocation8 + $0x24] sm:$0xf]
    %v2971 = vld [vmem:[#allocation8 + $0x28] sm:$0xf]
    %v2972 = vld [vmem:[#allocation8 + $0x2c] sm:$0xf]
    %v2973 = vld [vmem:[#allocation8 + $0x30] sm:$0xf]
    %v2974 = vld [vmem:[#allocation8 + $0x34] sm:$0xf]
    %v2975 = vld [vmem:[#allocation8 + $0x38] sm:$0xf]
    %v2976 = vld [vmem:[#allocation8 + $0x3c] sm:$0xf]
    %v2977 = vld [vmem:[#allocation8 + $0x40] sm:$0xf]
    %v2978 = vld [vmem:[#allocation8 + $0x44] sm:$0xf]
    %v2979 = vld [vmem:[#allocation8 + $0x48] sm:$0xf]
    %v2980 = vld [vmem:[#allocation8 + $0x4c] sm:$0xf]
    %v2981 = vld [vmem:[#allocation8 + $0x50] sm:$0xf]
    %v2982 = vld [vmem:[#allocation8 + $0x54] sm:$0xf]
    %v2983 = vld [vmem:[#allocation8 + $0x58] sm:$0xf]
    %v2984 = vld [vmem:[#allocation8 + $0x5c] sm:$0xf]
    %v2985 = vld [vmem:[#allocation8 + $0x60] sm:$0xf]
    %v2986 = vld [vmem:[#allocation8 + $0x64] sm:$0xf]
    %v2987 = vld [vmem:[#allocation8 + $0x68] sm:$0xf]
    %v2988 = vld [vmem:[#allocation8 + $0x6c] sm:$0xf]
    %v2989 = vld [vmem:[#allocation8 + $0x70] sm:$0xf]
    %v2990 = vld [vmem:[#allocation8 + $0x74] sm:$0xf]
    %v2991 = vld [vmem:[#allocation8 + $0x78] sm:$0xf]
    %v2992 = vld [vmem:[#allocation8 + $0x7c] sm:$0xf]
    %v2993 = vld [vmem:[#allocation8 + $0x80] sm:$0xf]
    %v2994 = vld [vmem:[#allocation8 + $0x84] sm:$0xf]
    %v2995 = vld [vmem:[#allocation8 + $0x88] sm:$0xf]
    %v2996 = vld [vmem:[#allocation8 + $0x8c] sm:$0xf]
    %v2997 = vld [vmem:[#allocation8 + $0x90] sm:$0xf]
    %v2998 = vld [vmem:[#allocation8 + $0x94] sm:$0xf]
    %v2999 = vld [vmem:[#allocation8 + $0x98] sm:$0xf]
    %v3000 = vld [vmem:[#allocation8 + $0x9c] sm:$0xf]
    %v3001 = vld [vmem:[#allocation8 + $0xa0] sm:$0xf]
    %v3002 = vld [vmem:[#allocation8 + $0xa4] sm:$0xf]
    %v3003 = vld [vmem:[#allocation8 + $0xa8] sm:$0xf]
    %v3004 = vld [vmem:[#allocation8 + $0xac] sm:$0xf]
    %v3005 = vld [vmem:[#allocation8 + $0xb0] sm:$0xf]
    %v3006 = vld [vmem:[#allocation8 + $0xb4] sm:$0xf]
    %v3007 = vld [vmem:[#allocation8 + $0xb8] sm:$0xf]
    %v3008 = vld [vmem:[#allocation8 + $0xbc] sm:$0xf]
    %v3009 = vld [vmem:[#allocation8 + $0xc0] sm:$0xf]
    %v3010 = vld [vmem:[#allocation8 + $0xc4] sm:$0xf]
    %v3011 = vld [vmem:[#allocation8 + $0xc8] sm:$0xf]
    %v3012 = vld [vmem:[#allocation8 + $0xcc] sm:$0xf]
    %v3013 = vld [vmem:[#allocation8 + $0xd0] sm:$0xf]
    %v3014 = vld [vmem:[#allocation8 + $0xd4] sm:$0xf]
    %v3015 = vld [vmem:[#allocation8 + $0xd8] sm:$0xf]
    %v3016 = vld [vmem:[#allocation8 + $0xdc] sm:$0xf]
    %v3017 = vld [vmem:[#allocation8 + $0xe0] sm:$0xf]
    %v3018 = vld [vmem:[#allocation8 + $0xe4] sm:$0xf]
    %v3019 = vld [vmem:[#allocation8 + $0xe8] sm:$0xf]
    %v3020 = vld [vmem:[#allocation8 + $0xec] sm:$0xf]
    %v3021 = vld [vmem:[#allocation8 + $0xf0] sm:$0xf]
    %v3022 = vld [vmem:[#allocation8 + $0xf4] sm:$0xf]
    %v3023 = vld [vmem:[#allocation8 + $0xf8] sm:$0xf]
    %v3024 = vld [vmem:[#allocation8 + $0xfc] sm:$0xf]
    %v3025 = vld [vmem:[#allocation8 + $0x100] sm:$0xf]
    %v3026 = vld [vmem:[#allocation8 + $0x104] sm:$0xf]
    %v3027 = vld [vmem:[#allocation8 + $0x108] sm:$0xf]
    %v3028 = vld [vmem:[#allocation8 + $0x10c] sm:$0xf]
    %v3029 = vld [vmem:[#allocation8 + $0x110] sm:$0xf]
    %v3030 = vld [vmem:[#allocation8 + $0x114] sm:$0xf]
    %v3031 = vld [vmem:[#allocation8 + $0x118] sm:$0xf]
    %v3032 = vld [vmem:[#allocation8 + $0x11c] sm:$0xf]
    %v3033 = vld [vmem:[#allocation8 + $0x120] sm:$0xf]
    %v3034 = vld [vmem:[#allocation8 + $0x124] sm:$0xf]
    %v3035 = vld [vmem:[#allocation8 + $0x128] sm:$0xf]
    %v3036 = vld [vmem:[#allocation8 + $0x12c] sm:$0xf]
    %v3037 = vld [vmem:[#allocation8 + $0x130] sm:$0xf]
    %v3038 = vld [vmem:[#allocation8 + $0x134] sm:$0xf]
    %v3039 = vld [vmem:[#allocation8 + $0x138] sm:$0xf]
    %v3040 = vld [vmem:[#allocation8 + $0x13c] sm:$0xf]
    %v3041 = vld [vmem:[#allocation8 + $0x140] sm:$0xf]
    %v3042 = vld [vmem:[#allocation8 + $0x144] sm:$0xf]
    %v3043 = vld [vmem:[#allocation8 + $0x148] sm:$0xf]
    %v3044 = vld [vmem:[#allocation8 + $0x14c] sm:$0xf]
    %v3045 = vld [vmem:[#allocation8 + $0x150] sm:$0xf]
    %v3046 = vld [vmem:[#allocation8 + $0x154] sm:$0xf]
    %v3047 = vld [vmem:[#allocation8 + $0x158] sm:$0xf]
    %v3048 = vld [vmem:[#allocation8 + $0x15c] sm:$0xf]
    %v3049 = vld [vmem:[#allocation8 + $0x160] sm:$0xf]
    %v3050 = vld [vmem:[#allocation8 + $0x164] sm:$0xf]
    %v3051 = vld [vmem:[#allocation8 + $0x168] sm:$0xf]
    %v3052 = vld [vmem:[#allocation8 + $0x16c] sm:$0xf]
    %v3053 = vld [vmem:[#allocation8 + $0x170] sm:$0xf]
    %v3054 = vld [vmem:[#allocation8 + $0x174] sm:$0xf]
    %v3055 = vld [vmem:[#allocation8 + $0x178] sm:$0xf]
    %v3056 = vld [vmem:[#allocation8 + $0x17c] sm:$0xf]
    %v3057 = vld [vmem:[#allocation8 + $0x180] sm:$0xf]
    %v3058 = vld [vmem:[#allocation8 + $0x184] sm:$0xf]
    %v3059 = vld [vmem:[#allocation8 + $0x188] sm:$0xf]
    %v3060 = vld [vmem:[#allocation8 + $0x18c] sm:$0xf]
    %v3061 = vld [vmem:[#allocation8 + $0x190] sm:$0xf]
    %v3062 = vld [vmem:[#allocation8 + $0x194] sm:$0xf]
    %v3063 = vld [vmem:[#allocation8 + $0x198] sm:$0xf]
    %v3064 = vld [vmem:[#allocation8 + $0x19c] sm:$0xf]
    %v3065 = vld [vmem:[#allocation8 + $0x1a0] sm:$0xf]
    %v3066 = vld [vmem:[#allocation8 + $0x1a4] sm:$0xf]
    %v3067 = vld [vmem:[#allocation8 + $0x1a8] sm:$0xf]
    %v3068 = vld [vmem:[#allocation8 + $0x1ac] sm:$0xf]
    %v3069 = vld [vmem:[#allocation8 + $0x1b0] sm:$0xf]
    %v3070 = vld [vmem:[#allocation8 + $0x1b4] sm:$0xf]
    %v3071 = vld [vmem:[#allocation8 + $0x1b8] sm:$0xf]
    %v3072 = vld [vmem:[#allocation8 + $0x1bc] sm:$0xf]
    %v3073 = vld [vmem:[#allocation8 + $0x1c0] sm:$0xf]
    %v3074 = vld [vmem:[#allocation8 + $0x1c4] sm:$0xf]
    %v3075 = vld [vmem:[#allocation8 + $0x1c8] sm:$0xf]
    %v3076 = vld [vmem:[#allocation8 + $0x1cc] sm:$0xf]
    %v3077 = vld [vmem:[#allocation8 + $0x1d0] sm:$0xf]
    %v3078 = vld [vmem:[#allocation8 + $0x1d4] sm:$0xf]
    %v3079 = vld [vmem:[#allocation8 + $0x1d8] sm:$0xf]
    %v3080 = vld [vmem:[#allocation8 + $0x1dc] sm:$0xf]
    %v3081 = vld [vmem:[#allocation8 + $0x1e0] sm:$0xf]
    %v3082 = vld [vmem:[#allocation8 + $0x1e4] sm:$0xf]
    %v3083 = vld [vmem:[#allocation8 + $0x1e8] sm:$0xf]
    %v3084 = vld [vmem:[#allocation8 + $0x1ec] sm:$0xf]
    %v3085 = vld [vmem:[#allocation8 + $0x1f0] sm:$0xf]
    %v3086 = vld [vmem:[#allocation8 + $0x1f4] sm:$0xf]
    %v3087 = vld [vmem:[#allocation8 + $0x1f8] sm:$0xf]
    %v3088 = vld [vmem:[#allocation8 + $0x1fc] sm:$0xf]
    %v3089 = vld [vmem:[#allocation10] sm:$0x1]
    %v3091 = vlaneseq
    %v3092 = vshrl.u32 %v3091, 7
    %v3093 = vsub.s32 0, %v3092
    %v3094 = vrot.slane %v3089, %v3093
    %v3224 = vunpack.c.l.b16 %v2961
    %v3225 = vunpack.c.l.b16 %v2962
    %v3226 = vunpack.c.l.b16 %v2963
    %v3227 = vunpack.c.l.b16 %v2964
    %v3228 = vunpack.c.l.b16 %v2965
    %v3229 = vunpack.c.l.b16 %v2966
    %v3230 = vunpack.c.l.b16 %v2967
    %v3231 = vunpack.c.l.b16 %v2968
    %v3232 = vunpack.c.l.b16 %v2969
    %v3233 = vunpack.c.l.b16 %v2970
    %v3234 = vunpack.c.l.b16 %v2971
    %v3235 = vunpack.c.l.b16 %v2972
    %v3236 = vunpack.c.l.b16 %v2973
    %v3237 = vunpack.c.l.b16 %v2974
    %v3238 = vunpack.c.l.b16 %v2975
    %v3239 = vunpack.c.l.b16 %v2976
    %v3240 = vunpack.c.l.b16 %v2977
    %v3241 = vunpack.c.l.b16 %v2978
    %v3242 = vunpack.c.l.b16 %v2979
    %v3243 = vunpack.c.l.b16 %v2980
    %v3244 = vunpack.c.l.b16 %v2981
    %v3245 = vunpack.c.l.b16 %v2982
    %v3246 = vunpack.c.l.b16 %v2983
    %v3247 = vunpack.c.l.b16 %v2984
    %v3248 = vunpack.c.l.b16 %v2985
    %v3249 = vunpack.c.l.b16 %v2986
    %v3250 = vunpack.c.l.b16 %v2987
    %v3251 = vunpack.c.l.b16 %v2988
    %v3252 = vunpack.c.l.b16 %v2989
    %v3253 = vunpack.c.l.b16 %v2990
    %v3254 = vunpack.c.l.b16 %v2991
    %v3255 = vunpack.c.l.b16 %v2992
    %v3256 = vunpack.c.l.b16 %v2993
    %v3257 = vunpack.c.l.b16 %v2994
    %v3258 = vunpack.c.l.b16 %v2995
    %v3259 = vunpack.c.l.b16 %v2996
    %v3260 = vunpack.c.l.b16 %v2997
    %v3261 = vunpack.c.l.b16 %v2998
    %v3262 = vunpack.c.l.b16 %v2999
    %v3263 = vunpack.c.l.b16 %v3000
    %v3264 = vunpack.c.l.b16 %v3001
    %v3265 = vunpack.c.l.b16 %v3002
    %v3266 = vunpack.c.l.b16 %v3003
    %v3267 = vunpack.c.l.b16 %v3004
    %v3268 = vunpack.c.l.b16 %v3005
    %v3269 = vunpack.c.l.b16 %v3006
    %v3270 = vunpack.c.l.b16 %v3007
    %v3271 = vunpack.c.l.b16 %v3008
    %v3272 = vunpack.c.l.b16 %v3009
    %v3273 = vunpack.c.l.b16 %v3010
    %v3274 = vunpack.c.l.b16 %v3011
    %v3275 = vunpack.c.l.b16 %v3012
    %v3276 = vunpack.c.l.b16 %v3013
    %v3277 = vunpack.c.l.b16 %v3014
    %v3278 = vunpack.c.l.b16 %v3015
    %v3279 = vunpack.c.l.b16 %v3016
    %v3280 = vunpack.c.l.b16 %v3017
    %v3281 = vunpack.c.l.b16 %v3018
    %v3282 = vunpack.c.l.b16 %v3019
    %v3283 = vunpack.c.l.b16 %v3020
    %v3284 = vunpack.c.l.b16 %v3021
    %v3285 = vunpack.c.l.b16 %v3022
    %v3286 = vunpack.c.l.b16 %v3023
    %v3287 = vunpack.c.l.b16 %v3024
    %v3288 = vunpack.c.l.b16 %v3025
    %v3289 = vunpack.c.l.b16 %v3026
    %v3290 = vunpack.c.l.b16 %v3027
    %v3291 = vunpack.c.l.b16 %v3028
    %v3292 = vunpack.c.l.b16 %v3029
    %v3293 = vunpack.c.l.b16 %v3030
    %v3294 = vunpack.c.l.b16 %v3031
    %v3295 = vunpack.c.l.b16 %v3032
    %v3296 = vunpack.c.l.b16 %v3033
    %v3297 = vunpack.c.l.b16 %v3034
    %v3298 = vunpack.c.l.b16 %v3035
    %v3299 = vunpack.c.l.b16 %v3036
    %v3300 = vunpack.c.l.b16 %v3037
    %v3301 = vunpack.c.l.b16 %v3038
    %v3302 = vunpack.c.l.b16 %v3039
    %v3303 = vunpack.c.l.b16 %v3040
    %v3304 = vunpack.c.l.b16 %v3041
    %v3305 = vunpack.c.l.b16 %v3042
    %v3306 = vunpack.c.l.b16 %v3043
    %v3307 = vunpack.c.l.b16 %v3044
    %v3308 = vunpack.c.l.b16 %v3045
    %v3309 = vunpack.c.l.b16 %v3046
    %v3310 = vunpack.c.l.b16 %v3047
    %v3311 = vunpack.c.l.b16 %v3048
    %v3312 = vunpack.c.l.b16 %v3049
    %v3313 = vunpack.c.l.b16 %v3050
    %v3314 = vunpack.c.l.b16 %v3051
    %v3315 = vunpack.c.l.b16 %v3052
    %v3316 = vunpack.c.l.b16 %v3053
    %v3317 = vunpack.c.l.b16 %v3054
    %v3318 = vunpack.c.l.b16 %v3055
    %v3319 = vunpack.c.l.b16 %v3056
    %v3320 = vunpack.c.l.b16 %v3057
    %v3321 = vunpack.c.l.b16 %v3058
    %v3322 = vunpack.c.l.b16 %v3059
    %v3323 = vunpack.c.l.b16 %v3060
    %v3324 = vunpack.c.l.b16 %v3061
    %v3325 = vunpack.c.l.b16 %v3062
    %v3326 = vunpack.c.l.b16 %v3063
    %v3327 = vunpack.c.l.b16 %v3064
    %v3328 = vunpack.c.l.b16 %v3065
    %v3329 = vunpack.c.l.b16 %v3066
    %v3330 = vunpack.c.l.b16 %v3067
    %v3331 = vunpack.c.l.b16 %v3068
    %v3332 = vunpack.c.l.b16 %v3069
    %v3333 = vunpack.c.l.b16 %v3070
    %v3334 = vunpack.c.l.b16 %v3071
    %v3335 = vunpack.c.l.b16 %v3072
    %v3336 = vunpack.c.l.b16 %v3073
    %v3337 = vunpack.c.l.b16 %v3074
    %v3338 = vunpack.c.l.b16 %v3075
    %v3339 = vunpack.c.l.b16 %v3076
    %v3340 = vunpack.c.l.b16 %v3077
    %v3341 = vunpack.c.l.b16 %v3078
    %v3342 = vunpack.c.l.b16 %v3079
    %v3343 = vunpack.c.l.b16 %v3080
    %v3344 = vunpack.c.l.b16 %v3081
    %v3345 = vunpack.c.l.b16 %v3082
    %v3346 = vunpack.c.l.b16 %v3083
    %v3347 = vunpack.c.l.b16 %v3084
    %v3348 = vunpack.c.l.b16 %v3085
    %v3349 = vunpack.c.l.b16 %v3086
    %v3350 = vunpack.c.l.b16 %v3087
    %v3351 = vunpack.c.l.b16 %v3088
    %v3352 = vpack.c.b16 %v3225, %v3224
    %v3353 = vpack.c.b16 %v3227, %v3226
    %v3354 = vpack.c.b16 %v3229, %v3228
    %v3355 = vpack.c.b16 %v3231, %v3230
    %v3356 = vpack.c.b16 %v3233, %v3232
    %v3357 = vpack.c.b16 %v3235, %v3234
    %v3358 = vpack.c.b16 %v3237, %v3236
    %v3359 = vpack.c.b16 %v3239, %v3238
    %v3360 = vpack.c.b16 %v3241, %v3240
    %v3361 = vpack.c.b16 %v3243, %v3242
    %v3362 = vpack.c.b16 %v3245, %v3244
    %v3363 = vpack.c.b16 %v3247, %v3246
    %v3364 = vpack.c.b16 %v3249, %v3248
    %v3365 = vpack.c.b16 %v3251, %v3250
    %v3366 = vpack.c.b16 %v3253, %v3252
    %v3367 = vpack.c.b16 %v3255, %v3254
    %v3368 = vpack.c.b16 %v3257, %v3256
    %v3369 = vpack.c.b16 %v3259, %v3258
    %v3370 = vpack.c.b16 %v3261, %v3260
    %v3371 = vpack.c.b16 %v3263, %v3262
    %v3372 = vpack.c.b16 %v3265, %v3264
    %v3373 = vpack.c.b16 %v3267, %v3266
    %v3374 = vpack.c.b16 %v3269, %v3268
    %v3375 = vpack.c.b16 %v3271, %v3270
    %v3376 = vpack.c.b16 %v3273, %v3272
    %v3377 = vpack.c.b16 %v3275, %v3274
    %v3378 = vpack.c.b16 %v3277, %v3276
    %v3379 = vpack.c.b16 %v3279, %v3278
    %v3380 = vpack.c.b16 %v3281, %v3280
    %v3381 = vpack.c.b16 %v3283, %v3282
    %v3382 = vpack.c.b16 %v3285, %v3284
    %v3383 = vpack.c.b16 %v3287, %v3286
    %v3384 = vpack.c.b16 %v3289, %v3288
    %v3385 = vpack.c.b16 %v3291, %v3290
    %v3386 = vpack.c.b16 %v3293, %v3292
    %v3387 = vpack.c.b16 %v3295, %v3294
    %v3388 = vpack.c.b16 %v3297, %v3296
    %v3389 = vpack.c.b16 %v3299, %v3298
    %v3390 = vpack.c.b16 %v3301, %v3300
    %v3391 = vpack.c.b16 %v3303, %v3302
    %v3392 = vpack.c.b16 %v3305, %v3304
    %v3393 = vpack.c.b16 %v3307, %v3306
    %v3394 = vpack.c.b16 %v3309, %v3308
    %v3395 = vpack.c.b16 %v3311, %v3310
    %v3396 = vpack.c.b16 %v3313, %v3312
    %v3397 = vpack.c.b16 %v3315, %v3314
    %v3398 = vpack.c.b16 %v3317, %v3316
    %v3399 = vpack.c.b16 %v3319, %v3318
    %v3400 = vpack.c.b16 %v3321, %v3320
    %v3401 = vpack.c.b16 %v3323, %v3322
    %v3402 = vpack.c.b16 %v3325, %v3324
    %v3403 = vpack.c.b16 %v3327, %v3326
    %v3404 = vpack.c.b16 %v3329, %v3328
    %v3405 = vpack.c.b16 %v3331, %v3330
    %v3406 = vpack.c.b16 %v3333, %v3332
    %v3407 = vpack.c.b16 %v3335, %v3334
    %v3408 = vpack.c.b16 %v3337, %v3336
    %v3409 = vpack.c.b16 %v3339, %v3338
    %v3410 = vpack.c.b16 %v3341, %v3340
    %v3411 = vpack.c.b16 %v3343, %v3342
    %v3412 = vpack.c.b16 %v3345, %v3344
    %v3413 = vpack.c.b16 %v3347, %v3346
    %v3414 = vpack.c.b16 %v3349, %v3348
    %v3415 = vpack.c.b16 %v3351, %v3350
    %3480 = vmatprep.subr.bf16.mxu0 0
    %3481 = vmatpush1.bf16.msra.mxu0 %v3359
    %3482 = vmatprep.subr.bf16.mxu0 0
    %3483 = vmatpush1.bf16.msra.mxu0 %v3358
    %3484 = vmatprep.subr.bf16.mxu0 0
    %3485 = vmatpush1.bf16.msra.mxu0 %v3357
    %3486 = vmatprep.subr.bf16.mxu0 0
    %3487 = vmatpush1.bf16.msra.mxu0 %v3356
    %3488 = vmatprep.subr.bf16.mxu0 0
    %3489 = vmatpush1.bf16.msra.mxu0 %v3355
    %3490 = vmatprep.subr.bf16.mxu0 0
    %3491 = vmatpush1.bf16.msra.mxu0 %v3354
    %3492 = vmatprep.subr.bf16.mxu0 0
    %3493 = vmatpush1.bf16.msra.mxu0 %v3353
    %3494 = vmatprep.subr.bf16.mxu0 0
    %3495 = vmatpush1.bf16.msra.mxu0 %v3352
    %3496 = vmatprep.subr.bf16.mxu0 0
    %3497 = vmatpush2.bf16.msra.mxu0 %v3367
    %3498 = vmatprep.subr.bf16.mxu0 0
    %3499 = vmatpush2.bf16.msra.mxu0 %v3366
    %3500 = vmatprep.subr.bf16.mxu0 0
    %3501 = vmatpush2.bf16.msra.mxu0 %v3365
    %3502 = vmatprep.subr.bf16.mxu0 0
    %3503 = vmatpush2.bf16.msra.mxu0 %v3364
    %3504 = vmatprep.subr.bf16.mxu0 0
    %3505 = vmatpush2.bf16.msra.mxu0 %v3363
    %3506 = vmatprep.subr.bf16.mxu0 0
    %3507 = vmatpush2.bf16.msra.mxu0 %v3362
    %3508 = vmatprep.subr.bf16.mxu0 0
    %3509 = vmatpush2.bf16.msra.mxu0 %v3361
    %3510 = vmatprep.subr.bf16.mxu0 0
    %3511 = vmatpush2.bf16.msra.mxu0 %v3360
    %3512 = vmatprep.mubr.bf16.mxu0 %v2954
    %3513 = vmatmul.mubr.bf16.gmra.mxu0 %v2953
    %v3514 = vpop.f32.mrf.mxu0
    %v3515 = vadd.f32 %v3094, %v3514
    %v3516 = vpop.f32.mrf.mxu0
    %v3517 = vpop.f32.mrf.mxu0
    %v3518 = vpop.f32.mrf.mxu0
    %3519 = vdwg.mxu0
    %3520 = vmatprep.subr.bf16.mxu0 0
    %3521 = vmatpush1.bf16.msra.mxu0 %v3375
    %3522 = vmatprep.subr.bf16.mxu0 0
    %3523 = vmatpush1.bf16.msra.mxu0 %v3374
    %3524 = vmatprep.subr.bf16.mxu0 0
    %3525 = vmatpush1.bf16.msra.mxu0 %v3373
    %3526 = vmatprep.subr.bf16.mxu0 0
    %3527 = vmatpush1.bf16.msra.mxu0 %v3372
    %3528 = vmatprep.subr.bf16.mxu0 0
    %3529 = vmatpush1.bf16.msra.mxu0 %v3371
    %3530 = vmatprep.subr.bf16.mxu0 0
    %3531 = vmatpush1.bf16.msra.mxu0 %v3370
    %3532 = vmatprep.subr.bf16.mxu0 0
    %3533 = vmatpush1.bf16.msra.mxu0 %v3369
    %3534 = vmatprep.subr.bf16.mxu0 0
    %3535 = vmatpush1.bf16.msra.mxu0 %v3368
    %3536 = vmatprep.subr.bf16.mxu0 0
    %3537 = vmatpush2.bf16.msra.mxu0 %v3383
    %3538 = vmatprep.subr.bf16.mxu0 0
    %3539 = vmatpush2.bf16.msra.mxu0 %v3382
    %3540 = vmatprep.subr.bf16.mxu0 0
    %3541 = vmatpush2.bf16.msra.mxu0 %v3381
    %3542 = vmatprep.subr.bf16.mxu0 0
    %3543 = vmatpush2.bf16.msra.mxu0 %v3380
    %3544 = vmatprep.subr.bf16.mxu0 0
    %3545 = vmatpush2.bf16.msra.mxu0 %v3379
    %3546 = vmatprep.subr.bf16.mxu0 0
    %3547 = vmatpush2.bf16.msra.mxu0 %v3378
    %3548 = vmatprep.subr.bf16.mxu0 0
    %3549 = vmatpush2.bf16.msra.mxu0 %v3377
    %3550 = vmatprep.subr.bf16.mxu0 0
    %3551 = vmatpush2.bf16.msra.mxu0 %v3376
    %3552 = vmatprep.mubr.bf16.mxu0 %v2956
    %3553 = vmatmul.mubr.bf16.gmra.mxu0 %v2955
    %v3554 = vpop.f32.mrf.mxu0
    %v3555 = vadd.f32 %v3515, %v3554
    %v3556 = vpop.f32.mrf.mxu0
    %v3557 = vpop.f32.mrf.mxu0
    %v3558 = vpop.f32.mrf.mxu0
    %3559 = vdwg.mxu0
    %3560 = vmatprep.subr.bf16.mxu0 0
    %3561 = vmatpush1.bf16.msra.mxu0 %v3391
    %3562 = vmatprep.subr.bf16.mxu0 0
    %3563 = vmatpush1.bf16.msra.mxu0 %v3390
    %3564 = vmatprep.subr.bf16.mxu0 0
    %3565 = vmatpush1.bf16.msra.mxu0 %v3389
    %3566 = vmatprep.subr.bf16.mxu0 0
    %3567 = vmatpush1.bf16.msra.mxu0 %v3388
    %3568 = vmatprep.subr.bf16.mxu0 0
    %3569 = vmatpush1.bf16.msra.mxu0 %v3387
    %3570 = vmatprep.subr.bf16.mxu0 0
    %3571 = vmatpush1.bf16.msra.mxu0 %v3386
    %3572 = vmatprep.subr.bf16.mxu0 0
    %3573 = vmatpush1.bf16.msra.mxu0 %v3385
    %3574 = vmatprep.subr.bf16.mxu0 0
    %3575 = vmatpush1.bf16.msra.mxu0 %v3384
    %3576 = vmatprep.subr.bf16.mxu0 0
    %3577 = vmatpush2.bf16.msra.mxu0 %v3399
    %3578 = vmatprep.subr.bf16.mxu0 0
    %3579 = vmatpush2.bf16.msra.mxu0 %v3398
    %3580 = vmatprep.subr.bf16.mxu0 0
    %3581 = vmatpush2.bf16.msra.mxu0 %v3397
    %3582 = vmatprep.subr.bf16.mxu0 0
    %3583 = vmatpush2.bf16.msra.mxu0 %v3396
    %3584 = vmatprep.subr.bf16.mxu0 0
    %3585 = vmatpush2.bf16.msra.mxu0 %v3395
    %3586 = vmatprep.subr.bf16.mxu0 0
    %3587 = vmatpush2.bf16.msra.mxu0 %v3394
    %3588 = vmatprep.subr.bf16.mxu0 0
    %3589 = vmatpush2.bf16.msra.mxu0 %v3393
    %3590 = vmatprep.subr.bf16.mxu0 0
    %3591 = vmatpush2.bf16.msra.mxu0 %v3392
    %3592 = vmatprep.mubr.bf16.mxu0 %v2958
    %3593 = vmatmul.mubr.bf16.gmra.mxu0 %v2957
    %v3594 = vpop.f32.mrf.mxu0
    %v3595 = vadd.f32 %v3555, %v3594
    %v3596 = vpop.f32.mrf.mxu0
    %v3597 = vpop.f32.mrf.mxu0
    %v3598 = vpop.f32.mrf.mxu0
    %3599 = vdwg.mxu0
    %3600 = vmatprep.subr.bf16.mxu0 0
    %3601 = vmatpush1.bf16.msra.mxu0 %v3407
    %3602 = vmatprep.subr.bf16.mxu0 0
    %3603 = vmatpush1.bf16.msra.mxu0 %v3406
    %3604 = vmatprep.subr.bf16.mxu0 0
    %3605 = vmatpush1.bf16.msra.mxu0 %v3405
    %3606 = vmatprep.subr.bf16.mxu0 0
    %3607 = vmatpush1.bf16.msra.mxu0 %v3404
    %3608 = vmatprep.subr.bf16.mxu0 0
    %3609 = vmatpush1.bf16.msra.mxu0 %v3403
    %3610 = vmatprep.subr.bf16.mxu0 0
    %3611 = vmatpush1.bf16.msra.mxu0 %v3402
    %3612 = vmatprep.subr.bf16.mxu0 0
    %3613 = vmatpush1.bf16.msra.mxu0 %v3401
    %3614 = vmatprep.subr.bf16.mxu0 0
    %3615 = vmatpush1.bf16.msra.mxu0 %v3400
    %3616 = vmatprep.subr.bf16.mxu0 0
    %3617 = vmatpush2.bf16.msra.mxu0 %v3415
    %3618 = vmatprep.subr.bf16.mxu0 0
    %3619 = vmatpush2.bf16.msra.mxu0 %v3414
    %3620 = vmatprep.subr.bf16.mxu0 0
    %3621 = vmatpush2.bf16.msra.mxu0 %v3413
    %3622 = vmatprep.subr.bf16.mxu0 0
    %3623 = vmatpush2.bf16.msra.mxu0 %v3412
    %3624 = vmatprep.subr.bf16.mxu0 0
    %3625 = vmatpush2.bf16.msra.mxu0 %v3411
    %3626 = vmatprep.subr.bf16.mxu0 0
    %3627 = vmatpush2.bf16.msra.mxu0 %v3410
    %3628 = vmatprep.subr.bf16.mxu0 0
    %3629 = vmatpush2.bf16.msra.mxu0 %v3409
    %3630 = vmatprep.subr.bf16.mxu0 0
    %3631 = vmatpush2.bf16.msra.mxu0 %v3408
    %3632 = vmatprep.mubr.bf16.mxu0 %v2960
    %3633 = vmatmul.mubr.bf16.gmra.mxu0 %v2959
    %v3634 = vpop.f32.mrf.mxu0
    %v3635 = vadd.f32 %v3595, %v3634
    %v3636 = vpop.f32.mrf.mxu0
    %v3637 = vpop.f32.mrf.mxu0
    %v3638 = vpop.f32.mrf.mxu0
    %3639 = vdwg.mxu0
    %v3640 = vld [vmem:[#allocation11] sm:$0x1]
    %v3642 = vlaneseq
    %v3643 = vshrl.u32 %v3642, 7
    %v3644 = vsub.s32 0, %v3643
    %v3645 = vrot.slane %v3640, %v3644
    %v3647 = vmul.f32 %v3635, %v3645
    %3648 = vadd.xlane.f32.xlu0 %v3647
    %v3649 = vpop.xlane.xlu0 %3648
    %v3650 = vld [vmem:[#allocation2] sm:$0x1]
    %v3652 = vlaneseq
    %v3653 = vshrl.u32 %v3652, 7
    %v3654 = vsub.s32 0, %v3653
    %v3655 = vrot.slane %v3650, %v3654
    %v3657 = vadd.f32 %v3649, %v3655
    %vm3658 = vcmask 7168
    %3659 = vst.msk [vmem:[%s7] sm:$0xff] %vm3658, %v3657
    // Predicated region
    $region54: #{mlp_forward.1} parent=1 // pred_check
      _
    $region55: #{mlp_forward.1} parent=1 // pred_check_branch
      %3661 = sbr.rel (0) target = $region57
    $region56: #{mlp_forward.1} parent=1 // pred_region
      _
    $region57: #{mlp_forward.1} parent=1 // pred_fallthru
      _
    // Predicated region
    $region58: #{mlp_forward.1} parent=1 // pred_check
      _
    $region59: #{mlp_forward.1} parent=1 // pred_check_branch
      %3663 = sbr.rel (0) target = $region61
    $region60: #{mlp_forward.1} parent=1 // pred_region
      _
    $region61: #{mlp_forward.1} parent=1 // pred_fallthru
      _
    %3664 = vsyncpa [#allocation4], 1
    %3665 = vsyncpa [#allocation6], 1
    %3666 = vsyncpa [#allocation9], 1
    %3667 = vsyncpa [#allocation12], 1

</llo_original>
